<compile_context>
chip_gen: v7x
topology: tpu7x:2x2x1
jax: 0.10.0
libtpu: 0.0.40
codegen_flags: <defaults>
</compile_context>

<pallas_src>
import functools

import jax
import jax.numpy as jnp
from jax.experimental import pallas as pl
from jax.experimental.pallas import tpu as pltpu

_VMEM_LIMIT = 32 * 1024 * 1024  # safe on v5e/v6e (128 MiB phys) and v7x (64 MiB)


def _pick_tile_t(T: int) -> int:
    # One tile when T is small; otherwise 512-wide (multiple of 128) tiles so
    # the auto-pipeline gets many steps to hide DMA and VMEM stays bounded.
    return T if T <= 512 else 512


def _glu_tile(K, D, pad, tile_t, fuse,
              xw_ref, wa_ref, wg_ref, ba_ref, bg_ref):
    """h = x + a * sigmoid(g) for one (C, tile_t) tile, accumulated in f32."""

    def win(lo):  # (C, tile_t) slice of the halo'd window
        return xw_ref[0, 0, :, lo:lo + tile_t]

    if fuse:
        # One deep contraction: (C, K*C) @ (K*C, tile_t)  (better MXU fill
        # when C is small; single vmatmul stream).
        x_stack = jnp.concatenate([win(k * D) for k in range(K)], axis=0)
        a = jnp.dot(wa_ref[...], x_stack, preferred_element_type=jnp.float32)
        g = jnp.dot(wg_ref[...], x_stack, preferred_element_type=jnp.float32)
    else:
        c_out = wa_ref.shape[1]
        a = jnp.zeros((c_out, tile_t), jnp.float32)
        g = jnp.zeros((c_out, tile_t), jnp.float32)
        for k in range(K):
            sl = win(k * D)
            a = a + jnp.dot(wa_ref[k], sl, preferred_element_type=jnp.float32)
            g = g + jnp.dot(wg_ref[k], sl, preferred_element_type=jnp.float32)
    a = a + ba_ref[...]
    g = g + bg_ref[...]
    res = win(pad).astype(jnp.float32)  # residual == original x columns
    return res + a * jax.nn.sigmoid(g)


def _convglu_kernel(K, D, pad, tile_t, fuse,
                    xw_ref, wa_ref, wg_ref, ba_ref, bg_ref, o_ref):
    h = _glu_tile(K, D, pad, tile_t, fuse,
                  xw_ref, wa_ref, wg_ref, ba_ref, bg_ref)
    o_ref[0] = h.astype(o_ref.dtype)


def _convglu_stats_kernel(K, D, pad, tile_t, fuse, t_valid,
                          xw_ref, wa_ref, wg_ref, ba_ref, bg_ref,
                          h_ref, s_ref, ss_ref):
    """Pass 1 of the conditioned path: h per tile + per-(b,c) sum / sumsq."""
    t = pl.program_id(1)
    h = _glu_tile(K, D, pad, tile_t, fuse,
                  xw_ref, wa_ref, wg_ref, ba_ref, bg_ref)
    h_ref[0] = h.astype(h_ref.dtype)

    @pl.when(t == 0)
    def _():
        s_ref[...] = jnp.zeros_like(s_ref)
        ss_ref[...] = jnp.zeros_like(ss_ref)

    # Mask columns past the true sequence length (partial last T tile).
    col = t * tile_t + jax.lax.broadcasted_iota(jnp.int32, h.shape, 1)
    hm = jnp.where(col < t_valid, h, 0.0)
    s_ref[0] += jnp.sum(hm, axis=1, keepdims=True)
    ss_ref[0] += jnp.sum(hm * hm, axis=1, keepdims=True)


def _cond_apply_kernel(eps, inv_t,
                       h_ref, s_ref, ss_ref, cond_ref,
                       ww_ref, wb_ref, bw_ref, bb_ref, o_ref):
    """Pass 2: instance-norm (from accumulated stats) + 1x1 cond affine."""
    mean = s_ref[0] * inv_t                                    # (C, 1)
    var = jnp.maximum(ss_ref[0] * inv_t - mean * mean, 0.0)
    rstd = jax.lax.rsqrt(var + eps)
    hn = (h_ref[0] - mean) * rstd                              # (C, tile_t)
    c = cond_ref[0]                                            # (Cc, tile_t)
    w = jnp.dot(ww_ref[...], c, preferred_element_type=jnp.float32) + bw_ref[...]
    b = jnp.dot(wb_ref[...], c, preferred_element_type=jnp.float32) + bb_ref[...]
    o_ref[0] = (hn * w + b).astype(o_ref.dtype)


def conv_glu(inputs_nct, wconv, bconv, kernels, dilations,
             cond_nct=None, wcond=None, bcond=None, eps=1e-5,
             compute_dtype=jnp.float32):
    """ConvGLU forward (eval mode).

    inputs_nct: [B, C, T]   wconv: [2C, C, K] (torch Conv1d), bconv: [2C]
    cond_nct:   [B, Cc, T]  wcond: [2C, Cc, 1],               bcond: [2C]
    compute_dtype: jnp.bfloat16 halves HBM/VMEM traffic of the big streams on
      v6e/v7x (accumulation stays f32); default f32 keeps tight numerics.
    """
    # TODO(synk): nn.Dropout is identity at inference time; no dropout applied.
    B, C, T = inputs_nct.shape
    K, D = kernels, dilations
    assert (K - 1) * D % 2 == 0, "residual requires conv output length == T"
    pad = (K - 1) * D // 2
    halo = 2 * pad

    tile_t = _pick_tile_t(T)
    n_t = (T + tile_t - 1) // tile_t
    twin = tile_t + halo

    # Single padded stream turned into overlapping halo windows with the tile
    # index as a major dim -> regular BlockSpec pipelining, aligned DMAs.
    # TODO(synk): window construction is still one wrapper-side XLA pass over
    # the activation (same cost class as the jnp.pad it replaces).
    xpad = jnp.pad(inputs_nct.astype(compute_dtype),
                   ((0, 0), (0, 0), (pad, n_t * tile_t + pad - T)))
    xwin = jnp.stack([xpad[:, :, t * tile_t:t * tile_t + twin]
                      for t in range(n_t)], axis=1)        # [B, nT, C, twin]

    # GLU halves as separate weights (avoid slicing a 2C accumulator at a
    # non-128 lane boundary).  Fuse the K taps when the contraction is shallow.
    fuse = (K * C) <= 256
    wa_t, wg_t = wconv[:C], wconv[C:]                       # (C, C, K) each
    if fuse:
        wa = jnp.transpose(wa_t, (0, 2, 1)).reshape(C, K * C)
        wg = jnp.transpose(wg_t, (0, 2, 1)).reshape(C, K * C)
        w_spec = pl.BlockSpec((C, K * C), lambda b, t: (0, 0))
    else:
        wa = jnp.transpose(wa_t, (2, 0, 1))                 # (K, C, C)
        wg = jnp.transpose(wg_t, (2, 0, 1))
        w_spec = pl.BlockSpec((K, C, C), lambda b, t: (0, 0, 0))
    wa = wa.astype(compute_dtype)
    wg = wg.astype(compute_dtype)
    ba = bconv[:C].reshape(C, 1).astype(jnp.float32)
    bg = bconv[C:].reshape(C, 1).astype(jnp.float32)

    grid = (B, n_t)
    win_spec = pl.BlockSpec((1, 1, C, twin), lambda b, t: (b, t, 0, 0))
    bias_spec = pl.BlockSpec((C, 1), lambda b, t: (0, 0))
    tile_spec = pl.BlockSpec((1, C, tile_t), lambda b, t: (b, 0, t))
    in_specs = [win_spec, w_spec, w_spec, bias_spec, bias_spec]

    if cond_nct is None:
        kern = functools.partial(_convglu_kernel, K, D, pad, tile_t, fuse)
        return pl.pallas_call(
            kern,
            out_shape=jax.ShapeDtypeStruct((B, C, T), jnp.float32),
            grid=grid,
            in_specs=in_specs,
            out_specs=tile_spec,
            compiler_params=pltpu.CompilerParams(
                dimension_semantics=("parallel", "parallel"),
                vmem_limit_bytes=_VMEM_LIMIT),
        )(xwin, wa, wg, ba, bg)

    # ---- conditioned path: two passes so instance-norm survives T-tiling ----
    Cc = cond_nct.shape[1]
    stat_spec = pl.BlockSpec((1, C, 1), lambda b, t: (b, 0, 0))
    kern1 = functools.partial(_convglu_stats_kernel, K, D, pad, tile_t, fuse, T)
    h, hsum, hsq = pl.pallas_call(
        kern1,
        out_shape=(jax.ShapeDtypeStruct((B, C, T), jnp.float32),
                   jax.ShapeDtypeStruct((B, C, 1), jnp.float32),
                   jax.ShapeDtypeStruct((B, C, 1), jnp.float32)),
        grid=grid,
        in_specs=in_specs,
        out_specs=(tile_spec, stat_spec, stat_spec),
        compiler_params=pltpu.CompilerParams(
            dimension_semantics=("parallel", "arbitrary"),  # stats accumulate over t
            vmem_limit_bytes=_VMEM_LIMIT),
    )(xwin, wa, wg, ba, bg)

    ww = wcond[:C, :, 0].astype(compute_dtype)              # "weight" half (C, Cc)
    wb = wcond[C:, :, 0].astype(compute_dtype)              # "bias"   half (C, Cc)
    bw = bcond[:C].reshape(C, 1).astype(jnp.float32)
    bb = bcond[C:].reshape(C, 1).astype(jnp.float32)
    cond = cond_nct.astype(compute_dtype)
    cond_spec = pl.BlockSpec((1, Cc, tile_t), lambda b, t: (b, 0, t))
    cw_spec = pl.BlockSpec((C, Cc), lambda b, t: (0, 0))

    kern2 = functools.partial(_cond_apply_kernel, float(eps), 1.0 / float(T))
    return pl.pallas_call(
        kern2,
        out_shape=jax.ShapeDtypeStruct((B, C, T), jnp.float32),
        grid=grid,
        in_specs=[tile_spec, stat_spec, stat_spec, cond_spec,
                  cw_spec, cw_spec, bias_spec, bias_spec],
        out_specs=tile_spec,
        compiler_params=pltpu.CompilerParams(
            dimension_semantics=("parallel", "parallel"),
            vmem_limit_bytes=_VMEM_LIMIT),
    )(h, hsum, hsq, cond, ww, wb, bw, bb)


def _reference(x_nct, wconv, bconv, K, D, cond_nct, wcond, bcond, eps=1e-5):
    """Pure-JAX reference matching the PyTorch module (eval mode)."""
    pad = (K - 1) * D // 2
    y = jax.lax.conv_general_dilated(
        x_nct, wconv, window_strides=(1,), padding=[(pad, pad)],
        rhs_dilation=(D,), dimension_numbers=("NCH", "OIH", "NCH"))
    y = y + bconv[None, :, None]
    a, g = jnp.split(y, 2, axis=1)
    x = x_nct + a * jax.nn.sigmoid(g)
    if cond_nct is not None:
        mean = x.mean(axis=-1, keepdims=True)
        var = ((x - mean) ** 2).mean(axis=-1, keepdims=True)
        xn = (x - mean) / jnp.sqrt(var + eps)
        wb = jnp.einsum("oc,bct->bot", wcond[:, :, 0], cond_nct) + bcond[None, :, None]
        w, b = jnp.split(wb, 2, axis=1)
        x = xn * w + b
    return x


if __name__ == "__main__":
    jax.config.update("jax_default_matmul_precision", "highest")
    key = jax.random.PRNGKey(0)

    def _params(k, C, Cc, K):
        k2, k3, k4, k5 = jax.random.split(k, 4)
        wconv = 0.1 * jax.random.normal(k2, (2 * C, C, K), jnp.float32)
        bconv = 0.1 * jax.random.normal(k3, (2 * C,), jnp.float32)
        wcond = 0.1 * jax.random.normal(k4, (2 * C, Cc, 1), jnp.float32)
        bcond = 0.1 * jax.random.normal(k5, (2 * C,), jnp.float32)
        return wconv, bconv, wcond, bcond

    configs = [
        # (B, C, Cc, T, K, D)
        (2, 16, 8, 16, 3, 1),     # small fused-tap tile
        (1, 96, 8, 48, 5, 2),     # non-fused weights (K*C > 256) + dilation
        (1, 16, 8, 1024, 3, 1),   # multi-tile T axis, two-pass instance norm
    ]
    for i, (B, C, Cc, T, K, D) in enumerate(configs):
        kx, kc, kp, key = jax.random.split(key, 4)
        x = jax.random.normal(kx, (B, C, T), jnp.float32)
        cond = jax.random.normal(kc, (B, Cc, T), jnp.float32)
        wconv, bconv, wcond, bcond = _params(kp, C, Cc, K)

        out_c = jax.block_until_ready(
            conv_glu(x, wconv, bconv, K, D, cond, wcond, bcond))
        out_p = jax.block_until_ready(conv_glu(x, wconv, bconv, K, D))
        ref_c = _reference(x, wconv, bconv, K, D, cond, wcond, bcond)
        ref_p = _reference(x, wconv, bconv, K, D, None, None, None)

        assert out_c.shape == (B, C, T) and out_p.shape == (B, C, T)
        assert jnp.allclose(out_c, ref_c, atol=1e-3, rtol=1e-3), f"cond mismatch cfg {i}"
        assert jnp.allclose(out_p, ref_p, atol=1e-3, rtol=1e-3), f"plain mismatch cfg {i}"

    print("KERNEL_OK")
</pallas_src>

<mosaic_0001>
module attributes {stable_mosaic.version = 11 : i64} {
  func.func @_convglu_stats_kernel(%arg0: i32, %arg1: i32, %arg2: memref<1x1x16x18xf32, #tpu.memory_space<vmem>>, %arg3: memref<16x48xf32, #tpu.memory_space<vmem>>, %arg4: memref<16x48xf32, #tpu.memory_space<vmem>>, %arg5: memref<16x1xf32, #tpu.memory_space<vmem>>, %arg6: memref<16x1xf32, #tpu.memory_space<vmem>>, %arg7: memref<1x16x16xf32, #tpu.memory_space<vmem>>, %arg8: memref<1x16x1xf32, #tpu.memory_space<vmem>>, %arg9: memref<1x16x1xf32, #tpu.memory_space<vmem>>) attributes {dimension_semantics = [#tpu.dimension_semantics<parallel>, #tpu.dimension_semantics<arbitrary>], iteration_bounds = array<i64: 2, 1>, scalar_prefetch = 0 : i64, scratch_operands = 0 : i64, tpu.core_type = #tpu.core_type<tc>, window_params = [{transform_indices = @transform_0, window_bounds = array<i64: 1, 1, 16, 18>}, {pipeline_mode = #tpu.pipeline_mode<synchronous>, transform_indices = @transform_1, window_bounds = array<i64: 16, 48>}, {pipeline_mode = #tpu.pipeline_mode<synchronous>, transform_indices = @transform_2, window_bounds = array<i64: 16, 48>}, {pipeline_mode = #tpu.pipeline_mode<synchronous>, transform_indices = @transform_3, window_bounds = array<i64: 16, 1>}, {pipeline_mode = #tpu.pipeline_mode<synchronous>, transform_indices = @transform_4, window_bounds = array<i64: 16, 1>}, {transform_indices = @transform_5, window_bounds = array<i64: 1, 16, 16>}, {transform_indices = @transform_6, window_bounds = array<i64: 1, 16, 1>}, {transform_indices = @transform_7, window_bounds = array<i64: 1, 16, 1>}]} {
    %c0 = arith.constant 0 : index
    %c0_0 = arith.constant 0 : index
    %c0_1 = arith.constant 0 : index
    %c0_2 = arith.constant 0 : index
    %0 = vector.load %arg2[%c0, %c0_0, %c0_1, %c0_2] : memref<1x1x16x18xf32, #tpu.memory_space<vmem>>, vector<1x1x16x16xf32>
    %1 = vector.shape_cast %0 : vector<1x1x16x16xf32> to vector<16x16xf32>
    %c0_3 = arith.constant 0 : index
    %c0_4 = arith.constant 0 : index
    %c0_5 = arith.constant 0 : index
    %c1 = arith.constant 1 : index
    %2 = vector.load %arg2[%c0_3, %c0_4, %c0_5, %c1] : memref<1x1x16x18xf32, #tpu.memory_space<vmem>>, vector<1x1x16x16xf32>
    %3 = vector.shape_cast %2 : vector<1x1x16x16xf32> to vector<16x16xf32>
    %c0_6 = arith.constant 0 : index
    %c0_7 = arith.constant 0 : index
    %c0_8 = arith.constant 0 : index
    %c2 = arith.constant 2 : index
    %4 = vector.load %arg2[%c0_6, %c0_7, %c0_8, %c2] : memref<1x1x16x18xf32, #tpu.memory_space<vmem>>, vector<1x1x16x16xf32>
    %5 = vector.shape_cast %4 : vector<1x1x16x16xf32> to vector<16x16xf32>
    %6 = tpu.concatenate %1, %3, %5 in 0 : vector<16x16xf32>, vector<16x16xf32>, vector<16x16xf32> -> vector<48x16xf32>
    %c0_9 = arith.constant 0 : index
    %c0_10 = arith.constant 0 : index
    %7 = vector.load %arg3[%c0_9, %c0_10] : memref<16x48xf32, #tpu.memory_space<vmem>>, vector<16x48xf32>
    %cst = arith.constant dense<0.000000e+00> : vector<16x16xf32>
    %8 = tpu.matmul %7, %6, %cst {dimension_numbers = #tpu.dot_dimension_numbers<[1], [0], [0], [1], [0, 0, 1, 1], [], []>, precision = #tpu.contract_precision<fp32>} : vector<16x48xf32>, vector<48x16xf32>, vector<16x16xf32> -> vector<16x16xf32>
    %c0_11 = arith.constant 0 : index
    %c0_12 = arith.constant 0 : index
    %9 = vector.load %arg4[%c0_11, %c0_12] : memref<16x48xf32, #tpu.memory_space<vmem>>, vector<16x48xf32>
    %cst_13 = arith.constant dense<0.000000e+00> : vector<16x16xf32>
    %10 = tpu.matmul %9, %6, %cst_13 {dimension_numbers = #tpu.dot_dimension_numbers<[1], [0], [0], [1], [0, 0, 1, 1], [], []>, precision = #tpu.contract_precision<fp32>} : vector<16x48xf32>, vector<48x16xf32>, vector<16x16xf32> -> vector<16x16xf32>
    %c0_14 = arith.constant 0 : index
    %c0_15 = arith.constant 0 : index
    %11 = vector.load %arg5[%c0_14, %c0_15] : memref<16x1xf32, #tpu.memory_space<vmem>>, vector<16x1xf32>
    %12 = vector.broadcast %11 : vector<16x1xf32> to vector<16x16xf32>
    %13 = arith.addf %8, %12 : vector<16x16xf32>
    %c0_16 = arith.constant 0 : index
    %c0_17 = arith.constant 0 : index
    %14 = vector.load %arg6[%c0_16, %c0_17] : memref<16x1xf32, #tpu.memory_space<vmem>>, vector<16x1xf32>
    %15 = vector.broadcast %14 : vector<16x1xf32> to vector<16x16xf32>
    %16 = arith.addf %10, %15 : vector<16x16xf32>
    %c0_18 = arith.constant 0 : index
    %c0_19 = arith.constant 0 : index
    %c0_20 = arith.constant 0 : index
    %c1_21 = arith.constant 1 : index
    %17 = vector.load %arg2[%c0_18, %c0_19, %c0_20, %c1_21] : memref<1x1x16x18xf32, #tpu.memory_space<vmem>>, vector<1x1x16x16xf32>
    %18 = vector.shape_cast %17 : vector<1x1x16x16xf32> to vector<16x16xf32>
    %19 = arith.negf %16 : vector<16x16xf32>
    %20 = math.exp %19 : vector<16x16xf32>
    %cst_22 = arith.constant 1.000000e+00 : f32
    %21 = vector.broadcast %cst_22 : f32 to vector<16x16xf32>
    %22 = arith.addf %21, %20 : vector<16x16xf32>
    %23 = arith.divf %21, %22 : vector<16x16xf32>
    %24 = arith.mulf %13, %23 : vector<16x16xf32>
    %25 = arith.addf %18, %24 : vector<16x16xf32>
    %c0_23 = arith.constant 0 : index
    %c0_24 = arith.constant 0 : index
    %c0_25 = arith.constant 0 : index
    %26 = vector.load %arg7[%c0_23, %c0_24, %c0_25] : memref<1x16x16xf32, #tpu.memory_space<vmem>>, vector<1x16x16xf32>
    %27 = vector.shape_cast %26 : vector<1x16x16xf32> to vector<16x16xf32>
    %28 = vector.shape_cast %25 : vector<16x16xf32> to vector<1x16x16xf32>
    tpu.vector_store %arg7[%c0_23, %c0_24, %c0_25], %28 {strides = array<i32>} : memref<1x16x16xf32, #tpu.memory_space<vmem>>, vector<1x16x16xf32>,
    %c0_i32 = arith.constant 0 : i32
    %29 = arith.cmpi eq, %arg1, %c0_i32 : i32
    %30 = arith.extui %29 : i1 to i32
    %c0_i32_26 = arith.constant 0 : i32
    %31 = arith.cmpi ne, %30, %c0_i32_26 : i32
    scf.if %31 {
      %cst_43 = arith.constant 0.000000e+00 : f32
      %57 = vector.broadcast %cst_43 : f32 to vector<1x16x1xf32>
      %c0_44 = arith.constant 0 : index
      %c0_45 = arith.constant 0 : index
      %c0_46 = arith.constant 0 : index
      %58 = vector.load %arg8[%c0_44, %c0_45, %c0_46] : memref<1x16x1xf32, #tpu.memory_space<vmem>>, vector<1x16x1xf32>
      tpu.vector_store %arg8[%c0_44, %c0_45, %c0_46], %57 {strides = array<i32>} : memref<1x16x1xf32, #tpu.memory_space<vmem>>, vector<1x16x1xf32>,
      %cst_47 = arith.constant 0.000000e+00 : f32
      %59 = vector.broadcast %cst_47 : f32 to vector<1x16x1xf32>
      %c0_48 = arith.constant 0 : index
      %c0_49 = arith.constant 0 : index
      %c0_50 = arith.constant 0 : index
      %60 = vector.load %arg9[%c0_48, %c0_49, %c0_50] : memref<1x16x1xf32, #tpu.memory_space<vmem>>, vector<1x16x1xf32>
      tpu.vector_store %arg9[%c0_48, %c0_49, %c0_50], %59 {strides = array<i32>} : memref<1x16x1xf32, #tpu.memory_space<vmem>>, vector<1x16x1xf32>,
    } else {
    }
    %c16_i32 = arith.constant 16 : i32
    %32 = arith.muli %arg1, %c16_i32 : i32
    %33 = tpu.iota {dimensions = array<i32: 1>} : vector<16x16xi32>
    %34 = vector.broadcast %32 : i32 to vector<16x16xi32>
    %35 = arith.addi %34, %33 : vector<16x16xi32>
    %c16_i32_27 = arith.constant 16 : i32
    %36 = vector.broadcast %c16_i32_27 : i32 to vector<16x16xi32>
    %37 = arith.cmpi slt, %35, %36 : vector<16x16xi32>
    %cst_28 = arith.constant 0.000000e+00 : f32
    %38 = vector.broadcast %cst_28 : f32 to vector<16x16xf32>
    %39 = arith.select %37, %25, %38 : vector<16x16xi1>, vector<16x16xf32>
    %c0_29 = arith.constant 0 : index
    %c0_30 = arith.constant 0 : index
    %c0_31 = arith.constant 0 : index
    %40 = vector.load %arg8[%c0_29, %c0_30, %c0_31] : memref<1x16x1xf32, #tpu.memory_space<vmem>>, vector<1x16x1xf32>
    %41 = vector.shape_cast %40 : vector<1x16x1xf32> to vector<16x1xf32>
    %cst_32 = arith.constant dense<0.000000e+00> : vector<16xf32>
    %42 = vector.multi_reduction <add>, %39, %cst_32 [1] : vector<16x16xf32> to vector<16xf32>
    %43 = vector.shape_cast %42 : vector<16xf32> to vector<16x1xf32>
    %44 = arith.addf %41, %43 : vector<16x1xf32>
    %c0_33 = arith.constant 0 : index
    %c0_34 = arith.constant 0 : index
    %c0_35 = arith.constant 0 : index
    %45 = vector.load %arg8[%c0_33, %c0_34, %c0_35] : memref<1x16x1xf32, #tpu.memory_space<vmem>>, vector<1x16x1xf32>
    %46 = vector.shape_cast %45 : vector<1x16x1xf32> to vector<16x1xf32>
    %47 = vector.shape_cast %44 : vector<16x1xf32> to vector<1x16x1xf32>
    tpu.vector_store %arg8[%c0_33, %c0_34, %c0_35], %47 {strides = array<i32>} : memref<1x16x1xf32, #tpu.memory_space<vmem>>, vector<1x16x1xf32>,
    %c0_36 = arith.constant 0 : index
    %c0_37 = arith.constant 0 : index
    %c0_38 = arith.constant 0 : index
    %48 = vector.load %arg9[%c0_36, %c0_37, %c0_38] : memref<1x16x1xf32, #tpu.memory_space<vmem>>, vector<1x16x1xf32>
    %49 = vector.shape_cast %48 : vector<1x16x1xf32> to vector<16x1xf32>
    %50 = arith.mulf %39, %39 : vector<16x16xf32>
    %cst_39 = arith.constant dense<0.000000e+00> : vector<16xf32>
    %51 = vector.multi_reduction <add>, %50, %cst_39 [1] : vector<16x16xf32> to vector<16xf32>
    %52 = vector.shape_cast %51 : vector<16xf32> to vector<16x1xf32>
    %53 = arith.addf %49, %52 : vector<16x1xf32>
    %c0_40 = arith.constant 0 : index
    %c0_41 = arith.constant 0 : index
    %c0_42 = arith.constant 0 : index
    %54 = vector.load %arg9[%c0_40, %c0_41, %c0_42] : memref<1x16x1xf32, #tpu.memory_space<vmem>>, vector<1x16x1xf32>
    %55 = vector.shape_cast %54 : vector<1x16x1xf32> to vector<16x1xf32>
    %56 = vector.shape_cast %53 : vector<16x1xf32> to vector<1x16x1xf32>
    tpu.vector_store %arg9[%c0_40, %c0_41, %c0_42], %56 {strides = array<i32>} : memref<1x16x1xf32, #tpu.memory_space<vmem>>, vector<1x16x1xf32>,
    return
  }
  func.func @transform_0(%arg0: i32, %arg1: i32) -> (i32, i32, i32, i32) {
    %c0_i32 = arith.constant 0 : i32
    %c0_i32_0 = arith.constant 0 : i32
    %c0_i32_1 = arith.constant 0 : i32
    return %arg0, %arg1, %c0_i32, %c0_i32_0 : i32, i32, i32, i32
  }
  func.func @transform_1(%arg0: i32, %arg1: i32) -> (i32, i32) {
    %c0_i32 = arith.constant 0 : i32
    %c0_i32_0 = arith.constant 0 : i32
    %c0_i32_1 = arith.constant 0 : i32
    return %c0_i32, %c0_i32_0 : i32, i32
  }
  func.func @transform_2(%arg0: i32, %arg1: i32) -> (i32, i32) {
    %c0_i32 = arith.constant 0 : i32
    %c0_i32_0 = arith.constant 0 : i32
    %c0_i32_1 = arith.constant 0 : i32
    return %c0_i32, %c0_i32_0 : i32, i32
  }
  func.func @transform_3(%arg0: i32, %arg1: i32) -> (i32, i32) {
    %c0_i32 = arith.constant 0 : i32
    %c0_i32_0 = arith.constant 0 : i32
    %c0_i32_1 = arith.constant 0 : i32
    return %c0_i32, %c0_i32_0 : i32, i32
  }
  func.func @transform_4(%arg0: i32, %arg1: i32) -> (i32, i32) {
    %c0_i32 = arith.constant 0 : i32
    %c0_i32_0 = arith.constant 0 : i32
    %c0_i32_1 = arith.constant 0 : i32
    return %c0_i32, %c0_i32_0 : i32, i32
  }
  func.func @transform_5(%arg0: i32, %arg1: i32) -> (i32, i32, i32) {
    %c0_i32 = arith.constant 0 : i32
    %c0_i32_0 = arith.constant 0 : i32
    return %arg0, %c0_i32, %arg1 : i32, i32, i32
  }
  func.func @transform_6(%arg0: i32, %arg1: i32) -> (i32, i32, i32) {
    %c0_i32 = arith.constant 0 : i32
    %c0_i32_0 = arith.constant 0 : i32
    %c0_i32_1 = arith.constant 0 : i32
    return %arg0, %c0_i32, %c0_i32_0 : i32, i32, i32
  }
  func.func @transform_7(%arg0: i32, %arg1: i32) -> (i32, i32, i32) {
    %c0_i32 = arith.constant 0 : i32
    %c0_i32_0 = arith.constant 0 : i32
    %c0_i32_1 = arith.constant 0 : i32
    return %arg0, %c0_i32, %c0_i32_0 : i32, i32, i32
  }
}

</mosaic_0001>

<llo_original>
// kernel: tpu_custom_call.1
$region0: #{tpu_custom_call.1}
  #allocation0 [shape = 'u32[]', space=smem, size = 0x4, offset = 0x4, fixed_abs, tag = 'smem constant byte address 0x4 - core index']
  #allocation1 [shape = 'u32[144,128]{1,0:T(1,128)}', space=vmem, size = 0x12000, scoped, tag = 'internal scratch']
  %s0 = inlined_call_operand.vmem [shape: f32[2,1,16,18], index: 0, kind: input, shape index: {}]
  %s1 = inlined_call_operand.hbm [shape: f32[16,48], index: 1, kind: input, shape index: {}]
  %s2 = inlined_call_operand.hbm [shape: f32[16,48], index: 2, kind: input, shape index: {}]
  %s3 = inlined_call_operand.vmem [shape: f32[16,1], index: 3, kind: input, shape index: {}]
  %s4 = inlined_call_operand.vmem [shape: f32[16,1], index: 4, kind: input, shape index: {}]
  %s5 = inlined_call_operand.hbm [shape: f32[2,16,16], index: 5, kind: output, shape index: {0}]
  %s6 = inlined_call_operand.vmem [shape: f32[2,16,1], index: 6, kind: output, shape index: {1}]
  %s7 = inlined_call_operand.vmem [shape: f32[2,16,1], index: 7, kind: output, shape index: {2}]
  %8 = xla_tuple %s5, %s6, %s7
  %s9 = sld [smem:[#allocation0]]
  $region81: #{tpu_custom_call.1} parent=0
    _
  %s11 = ssub.s32 1, %s9
  %s12 = scalar_select 0, %s11, %s9
  $region1: #{tpu_custom_call.1} parent=0
    #allocation2 [shape = 'u8[8192]{0}', space=vmem, size = 0x2000, scoped, tag = 'input window, operand 1, single buffered']
    #allocation3 [shape = 's32[2]{0}', space=sflag, size = 0x8, scoped, tag = 'scoped memory for tpu_custom_call.1']
    #allocation4 [shape = 's32[2]{0}', space=sflag, size = 0x8, scoped, tag = 'scoped memory for tpu_custom_call.1']
    #allocation5 [shape = 'u8[8192]{0}', space=vmem, size = 0x2000, scoped, tag = 'input window, operand 2, single buffered']
    #allocation6 [shape = 's32[1]{0}', space=sflag, size = 0x4, scoped, tag = 'scoped memory for tpu_custom_call.1']
    #allocation7 [shape = 'u8[16384]{0}', space=vmem, size = 0x4000, scoped, tag = 'output window, operand 0']
    %13 = vsyncpa [#allocation3], 0
    %14 = vsyncpa [#allocation6], 0
    %15 = vsyncpa [#allocation4], 0
    %s16 = scalar_lea.sflag [#allocation4], 1
    %17 = vsyncpa %s16, 0
    loop: start=0, step=1, limit=4
    $region2: #{tpu_custom_call.1} parent=1 // loop_pre_header
      _
    $region3: #{tpu_custom_call.1} parent=1 // loop_header
      %s19 = sphi 0, %s23
      %p20 = scmp.ge.s32.totalorder %s19, 4
      %s26 = sphi 0, %s38
      %s27 = sphi 0, %s34
      %s28 = sphi 0, %s26
      %s29 = sphi 0, %s27
      %s30 = sphi 0, %s28
      %s31 = sphi 0, %s29
      %s43 = sphi 0, %s45
      %s46 = sphi 0, %s43
      %s47 = sphi 0, %s46
      %s63 = sphi 0, %s47
      %s67 = sphi 0, %s67
      %s69 = sphi 0, %s67
      %s70 = sphi 0, %s69
      %s84 = sphi 0, %s70
      %s88 = sphi 0, %s88
      %s90 = sphi 0, %s88
      %s91 = sphi 0, %s90
      %s105 = sphi 0, %s91
      %s109 = sphi 0, %s109
      %s111 = sphi 0, %s109
      %s112 = sphi 0, %s111
      %s126 = sphi 0, %s112
      %s130 = sphi 0, %s130
      %s132 = sphi 0, %s130
      %s133 = sphi 0, %s132
      %s147 = sphi 0, %s133
      %s155 = sphi 0, %s157
      %s158 = sphi 0, %s155
      %s159 = sphi 0, %s158
      %s175 = sphi 0, %s159
      %s181 = sphi 0, %s183
      %s184 = sphi 0, %s181
      %s185 = sphi 0, %s184
      %s201 = sphi 0, %s185
      %s207 = sphi 0, %s209
      %s210 = sphi 0, %s207
      %s211 = sphi 0, %s210
      %s227 = sphi 0, %s211
    $region4: #{tpu_custom_call.1} parent=1 // loop_header_branch
      %22 = sbr.rel (%p20) target = $region8
    $region5: #{tpu_custom_call.1} parent=1 // loop_body
      %s24 = ssub.s32 %s19, 1
      %s25 = ssub.s32 %s19, 2
      %s32 = sadd.s32 1, %s27
      %p33 = scmp.ge.s32.totalorder %s32, 1
      %s34 = scalar_select %p33, 0, %s32
      %s35 = sadd.s32 1, %s26
      %s36 = scalar_select %p33, %s35, %s26
      %p37 = scmp.ge.s32.totalorder %s36, 2
      %s38 = scalar_select %p37, 0, %s36
      %s39 = ssub.s32 %s26, %s38
      %s40 = ssub.s32 %s27, %s34
      %s41 = sor.u32 %s39, %s40
      %p42 = scmp.eq.s32.totalorder %s41, 0
      %s44 = sadd.s32 %s43, 1
      %s45 = scalar_select %p42, %s43, %s44
      %p48 = pneg %p42
      %p49 = scmp.eq.s32.totalorder %s19, 1
      %p50 = por %p48, %p49
      %p51 = scmp.ne.s32.totalorder %s43, %s46
      %p52 = scmp.eq.s32.totalorder %s19, 0
      %p53 = por %p51, %p52
      %p54 = scmp.ne.s32.totalorder %s43, %s46
      %p55 = scmp.eq.s32.totalorder %s24, 1
      %p56 = por %p54, %p55
      %p57 = scmp.ne.s32.totalorder %s46, %s47
      %p58 = scmp.eq.s32.totalorder %s24, 0
      %p59 = por %p57, %p58
      %p60 = scmp.ne.s32.totalorder %s46, %s47
      %p61 = scmp.eq.s32.totalorder %s25, 1
      %p62 = por %p60, %p61
      %p64 = scmp.ne.s32.totalorder %s47, %s63
      %p65 = scmp.eq.s32.totalorder %s25, 0
      %p66 = por %p64, %p65
      %s68 = sadd.s32 %s67, 1
      %p71 = scmp.eq.s32.totalorder %s19, 1
      %p72 = scmp.ne.s32.totalorder %s67, %s69
      %p73 = scmp.eq.s32.totalorder %s19, 0
      %p74 = por %p72, %p73
      %p75 = scmp.ne.s32.totalorder %s67, %s69
      %p76 = scmp.eq.s32.totalorder %s24, 1
      %p77 = por %p75, %p76
      %p78 = scmp.ne.s32.totalorder %s69, %s70
      %p79 = scmp.eq.s32.totalorder %s24, 0
      %p80 = por %p78, %p79
      %p81 = scmp.ne.s32.totalorder %s69, %s70
      %p82 = scmp.eq.s32.totalorder %s25, 1
      %p83 = por %p81, %p82
      %p85 = scmp.ne.s32.totalorder %s70, %s84
      %p86 = scmp.eq.s32.totalorder %s25, 0
      %p87 = por %p85, %p86
      %s89 = sadd.s32 %s88, 1
      %p92 = scmp.eq.s32.totalorder %s19, 1
      %p93 = scmp.ne.s32.totalorder %s88, %s90
      %p94 = scmp.eq.s32.totalorder %s19, 0
      %p95 = por %p93, %p94
      %p96 = scmp.ne.s32.totalorder %s88, %s90
      %p97 = scmp.eq.s32.totalorder %s24, 1
      %p98 = por %p96, %p97
      %p99 = scmp.ne.s32.totalorder %s90, %s91
      %p100 = scmp.eq.s32.totalorder %s24, 0
      %p101 = por %p99, %p100
      %p102 = scmp.ne.s32.totalorder %s90, %s91
      %p103 = scmp.eq.s32.totalorder %s25, 1
      %p104 = por %p102, %p103
      %p106 = scmp.ne.s32.totalorder %s91, %s105
      %p107 = scmp.eq.s32.totalorder %s25, 0
      %p108 = por %p106, %p107
      %s110 = sadd.s32 %s109, 1
      %p113 = scmp.eq.s32.totalorder %s19, 1
      %p114 = scmp.ne.s32.totalorder %s109, %s111
      %p115 = scmp.eq.s32.totalorder %s19, 0
      %p116 = por %p114, %p115
      %p117 = scmp.ne.s32.totalorder %s109, %s111
      %p118 = scmp.eq.s32.totalorder %s24, 1
      %p119 = por %p117, %p118
      %p120 = scmp.ne.s32.totalorder %s111, %s112
      %p121 = scmp.eq.s32.totalorder %s24, 0
      %p122 = por %p120, %p121
      %p123 = scmp.ne.s32.totalorder %s111, %s112
      %p124 = scmp.eq.s32.totalorder %s25, 1
      %p125 = por %p123, %p124
      %p127 = scmp.ne.s32.totalorder %s112, %s126
      %p128 = scmp.eq.s32.totalorder %s25, 0
      %p129 = por %p127, %p128
      %s131 = sadd.s32 %s130, 1
      %p134 = scmp.eq.s32.totalorder %s19, 1
      %p135 = scmp.ne.s32.totalorder %s130, %s132
      %p136 = scmp.eq.s32.totalorder %s19, 0
      %p137 = por %p135, %p136
      %p138 = scmp.ne.s32.totalorder %s130, %s132
      %p139 = scmp.eq.s32.totalorder %s24, 1
      %p140 = por %p138, %p139
      %p141 = scmp.ne.s32.totalorder %s132, %s133
      %p142 = scmp.eq.s32.totalorder %s24, 0
      %p143 = por %p141, %p142
      %p144 = scmp.ne.s32.totalorder %s132, %s133
      %p145 = scmp.eq.s32.totalorder %s25, 1
      %p146 = por %p144, %p145
      %p148 = scmp.ne.s32.totalorder %s133, %s147
      %p149 = scmp.eq.s32.totalorder %s25, 0
      %p150 = por %p148, %p149
      %s151 = ssub.s32 %s26, %s38
      %s152 = ssub.s32 %s27, %s34
      %s153 = sor.u32 %s151, %s152
      %p154 = scmp.eq.s32.totalorder %s153, 0
      %s156 = sadd.s32 %s155, 1
      %s157 = scalar_select %p154, %s155, %s156
      %p160 = pneg %p154
      %p161 = scmp.eq.s32.totalorder %s19, 1
      %p162 = por %p160, %p161
      %p163 = scmp.ne.s32.totalorder %s155, %s158
      %p164 = scmp.eq.s32.totalorder %s19, 0
      %p165 = por %p163, %p164
      %p166 = scmp.ne.s32.totalorder %s155, %s158
      %p167 = scmp.eq.s32.totalorder %s24, 1
      %p168 = por %p166, %p167
      %p169 = scmp.ne.s32.totalorder %s158, %s159
      %p170 = scmp.eq.s32.totalorder %s24, 0
      %p171 = por %p169, %p170
      %p172 = scmp.ne.s32.totalorder %s158, %s159
      %p173 = scmp.eq.s32.totalorder %s25, 1
      %p174 = por %p172, %p173
      %p176 = scmp.ne.s32.totalorder %s159, %s175
      %p177 = scmp.eq.s32.totalorder %s25, 0
      %p178 = por %p176, %p177
      %s179 = ssub.s32 %s26, %s38
      %p180 = scmp.eq.s32.totalorder %s179, 0
      %s182 = sadd.s32 %s181, 1
      %s183 = scalar_select %p180, %s181, %s182
      %p186 = pneg %p180
      %p187 = scmp.eq.s32.totalorder %s19, 1
      %p188 = por %p186, %p187
      %p189 = scmp.ne.s32.totalorder %s181, %s184
      %p190 = scmp.eq.s32.totalorder %s19, 0
      %p191 = por %p189, %p190
      %p192 = scmp.ne.s32.totalorder %s181, %s184
      %p193 = scmp.eq.s32.totalorder %s24, 1
      %p194 = por %p192, %p193
      %p195 = scmp.ne.s32.totalorder %s184, %s185
      %p196 = scmp.eq.s32.totalorder %s24, 0
      %p197 = por %p195, %p196
      %p198 = scmp.ne.s32.totalorder %s184, %s185
      %p199 = scmp.eq.s32.totalorder %s25, 1
      %p200 = por %p198, %p199
      %p202 = scmp.ne.s32.totalorder %s185, %s201
      %p203 = scmp.eq.s32.totalorder %s25, 0
      %p204 = por %p202, %p203
      %s205 = ssub.s32 %s26, %s38
      %p206 = scmp.eq.s32.totalorder %s205, 0
      %s208 = sadd.s32 %s207, 1
      %s209 = scalar_select %p206, %s207, %s208
      %p212 = pneg %p206
      %p213 = scmp.eq.s32.totalorder %s19, 1
      %p214 = por %p212, %p213
      %p215 = scmp.ne.s32.totalorder %s207, %s210
      %p216 = scmp.eq.s32.totalorder %s19, 0
      %p217 = por %p215, %p216
      %p218 = scmp.ne.s32.totalorder %s207, %s210
      %p219 = scmp.eq.s32.totalorder %s24, 1
      %p220 = por %p218, %p219
      %p221 = scmp.ne.s32.totalorder %s210, %s211
      %p222 = scmp.eq.s32.totalorder %s24, 0
      %p223 = por %p221, %p222
      %p224 = scmp.ne.s32.totalorder %s210, %s211
      %p225 = scmp.eq.s32.totalorder %s25, 1
      %p226 = por %p224, %p225
      %p228 = scmp.ne.s32.totalorder %s211, %s227
      %p229 = scmp.eq.s32.totalorder %s25, 0
      %p230 = por %p228, %p229
      %p231 = scmp.le.s32.totalorder 1, %s19
      %p232 = scmp.lt.s32.totalorder %s19, 3
      %p233 = pnand %p231, %p232
      %p234 = pneg %p233
      // Predicated region
      $region9: #{tpu_custom_call.1} parent=5 // pred_check
        _
      $region10: #{tpu_custom_call.1} parent=5 // pred_check_branch
        %236 = sbr.rel (%p233) target = $region12
      $region11: #{tpu_custom_call.1} parent=5 // pred_region
        %s237 = ssub.s32 %s19, 1
        // Predicated region
        $region13: #{tpu_custom_call.1} parent=11 // pred_check
          %p238 = pneg %p80
        $region14: #{tpu_custom_call.1} parent=11 // pred_check_branch
          %240 = sbr.rel (%p238) target = $region16
        $region15: #{tpu_custom_call.1} parent=11 // pred_region
          %s242 = ssub.s32 256, 256
          %243 = vsyncadd [#allocation3], %s242
          %s244 = sshll.u32 [#allocation2], 4
          %s245 = int_to_ptr.vmem [resolvable:$true] %s244
          %250 = dma.hbm_to_vmem [thread:$0]  %s1, 256, %s245, [#allocation3], 128, 128, 8
        $region16: #{tpu_custom_call.1} parent=11 // pred_fallthru
          _
        // Predicated region
        $region17: #{tpu_custom_call.1} parent=11 // pred_check
          %p251 = pneg %p101
        $region18: #{tpu_custom_call.1} parent=11 // pred_check_branch
          %253 = sbr.rel (%p251) target = $region20
        $region19: #{tpu_custom_call.1} parent=11 // pred_region
          %s255 = ssub.s32 256, 256
          %256 = vsyncadd [#allocation6], %s255
          %s257 = sshll.u32 [#allocation5], 4
          %s258 = int_to_ptr.vmem [resolvable:$true] %s257
          %263 = dma.hbm_to_vmem [thread:$0]  %s2, 256, %s258, [#allocation6], 128, 128, 8
        $region20: #{tpu_custom_call.1} parent=11 // pred_fallthru
          _
        // Predicated region
        $region21: #{tpu_custom_call.1} parent=11 // pred_check
          %p264 = pneg %p122
        $region22: #{tpu_custom_call.1} parent=11 // pred_check_branch
          %266 = sbr.rel (%p264) target = $region24
        $region23: #{tpu_custom_call.1} parent=11 // pred_region
          _
        $region24: #{tpu_custom_call.1} parent=11 // pred_fallthru
          _
        // Predicated region
        $region25: #{tpu_custom_call.1} parent=11 // pred_check
          %p267 = pneg %p143
        $region26: #{tpu_custom_call.1} parent=11 // pred_check_branch
          %269 = sbr.rel (%p267) target = $region28
        $region27: #{tpu_custom_call.1} parent=11 // pred_region
          _
        $region28: #{tpu_custom_call.1} parent=11 // pred_fallthru
          _
      $region12: #{tpu_custom_call.1} parent=5 // pred_fallthru
        _
      %p270 = scmp.lt.s32.totalorder %s19, 2
      // Predicated region
      $region29: #{tpu_custom_call.1} parent=5 // pred_check
        %p271 = pneg %p270
      $region30: #{tpu_custom_call.1} parent=5 // pred_check_branch
        %273 = sbr.rel (%p271) target = $region32
      $region31: #{tpu_custom_call.1} parent=5 // pred_region
        // Predicated region
        $region33: #{tpu_custom_call.1} parent=31 // pred_check
          %p274 = pneg %p53
        $region34: #{tpu_custom_call.1} parent=31 // pred_check_branch
          %276 = sbr.rel (%p274) target = $region36
        $region35: #{tpu_custom_call.1} parent=31 // pred_region
          %p277 = scmp.lt.s32.totalorder %s26, 1
          %s278 = scalar_select %p277, %s26, 1
          %p279 = scmp.lt.s32.totalorder %s27, 0
          %s280 = scalar_select %p279, %s27, 0
          %s281 = smul.addr %s280, 2
          %s282 = smul.addr %s278, 2
          %s283 = sadd.s32 %s281, %s282
          %s284 = smul.addr %s283, 8
          %s285 = scalar_lea.vmem %s0, %s284
        $region36: #{tpu_custom_call.1} parent=31 // pred_fallthru
          _
      $region32: #{tpu_custom_call.1} parent=5 // pred_fallthru
        _
      %p286 = scmp.le.s32.totalorder 1, %s19
      %p287 = scmp.lt.s32.totalorder %s19, 3
      %p288 = pnand %p286, %p287
      %p289 = pneg %p288
      // Predicated region
      $region37: #{tpu_custom_call.1} parent=5 // pred_check
        _
      $region38: #{tpu_custom_call.1} parent=5 // pred_check_branch
        %291 = sbr.rel (%p288) target = $region40
      $region39: #{tpu_custom_call.1} parent=5 // pred_region
        %s292 = ssub.s32 %s19, 1
        // Predicated region
        $region41: #{tpu_custom_call.1} parent=39 // pred_check
          %p293 = pneg %p80
        $region42: #{tpu_custom_call.1} parent=39 // pred_check_branch
          %295 = sbr.rel (%p293) target = $region44
        $region43: #{tpu_custom_call.1} parent=39 // pred_region
          %296 = dma.done [#allocation3], 256
        $region44: #{tpu_custom_call.1} parent=39 // pred_fallthru
          _
        // Predicated region
        $region45: #{tpu_custom_call.1} parent=39 // pred_check
          %p297 = pneg %p101
        $region46: #{tpu_custom_call.1} parent=39 // pred_check_branch
          %299 = sbr.rel (%p297) target = $region48
        $region47: #{tpu_custom_call.1} parent=39 // pred_region
          %300 = dma.done [#allocation6], 256
        $region48: #{tpu_custom_call.1} parent=39 // pred_fallthru
          _
        %p301 = scmp.lt.s32.totalorder %s28, 1
        %s302 = scalar_select %p301, %s28, 1
        %p303 = scmp.lt.s32.totalorder %s29, 0
        %s304 = scalar_select %p303, %s29, 0
        %s305 = smul.addr %s304, 2
        %s306 = smul.addr %s302, 2
        %s307 = sadd.s32 %s305, %s306
        %s308 = smul.addr %s307, 8
        %s309 = scalar_lea.vmem %s0, %s308
        %p310 = pneg %p59
        %p311 = pneg %p56
        %p312 = pneg %p80
        %p313 = pneg %p77
        %p314 = pneg %p101
        %p315 = pneg %p98
        %p316 = pneg %p122
        %p317 = pneg %p119
        %p318 = pneg %p143
        %p319 = pneg %p140
        %p320 = pneg %p171
        %p321 = pneg %p168
        %s322 = sand.u32 %s158, 1
        %s323 = scalar_lea.sflag [#allocation4], %s322
        %s324 = sand.u32 %s158, 1
        %s325 = smul.addr %s324, 16
        %s326 = scalar_lea.vmem [#allocation7], %s325
        %p327 = pneg %p197
        %p328 = pneg %p194
        %p329 = scmp.lt.s32.totalorder %s28, 1
        %s330 = scalar_select %p329, %s28, 1
        %s331 = smul.addr %s330, 2
        %s332 = smul.addr %s331, 8
        %s333 = scalar_lea.vmem %s6, %s332
        %p334 = pneg %p223
        %p335 = pneg %p220
        %p336 = scmp.lt.s32.totalorder %s28, 1
        %s337 = scalar_select %p336, %s28, 1
        %s338 = smul.addr %s337, 2
        %s339 = smul.addr %s338, 8
        %s340 = scalar_lea.vmem %s7, %s339
        %p341 = scmp.lt.s32.totalorder %s28, 1
        %s342 = scalar_select %p341, %s28, 1
        %p343 = scmp.lt.s32.totalorder %s29, 0
        %s344 = scalar_select %p343, %s29, 0
        %s345 = smul.addr %s344, 2
        %s346 = smul.addr %s342, 2
        %s347 = sadd.s32 %s345, %s346
        %s348 = smul.addr %s347, 8
        %s349 = scalar_lea.vmem %s0, %s348
        %p350 = scmp.lt.s32.totalorder %s28, 1
        %s351 = scalar_select %p350, %s28, 1
        %s352 = smul.addr %s351, 2
        %s353 = smul.addr %s352, 8
        %s354 = scalar_lea.vmem %s6, %s353
        %p355 = scmp.lt.s32.totalorder %s28, 1
        %s356 = scalar_select %p355, %s28, 1
        %s357 = smul.addr %s356, 2
        %s358 = smul.addr %s357, 8
        %s359 = scalar_lea.vmem %s7, %s358
        %v360 = vld [vmem:[%s349] sm:$0xff]
        %v361 = vld [vmem:[%s349 + $0x8] sm:$0xff]
        %364 = vrot.lane.b32.xlu0 %v360, 127
        %v365 = vpop.permute.xlu0 %364
        %366 = vrot.lane.b32.xlu0 %v361, 127
        %v367 = vpop.permute.xlu0 %366
        %370 = vrot.lane.b32.xlu0 %v360, 126
        %v371 = vpop.permute.xlu0 %370
        %372 = vrot.lane.b32.xlu0 %v361, 126
        %v373 = vpop.permute.xlu0 %372
        %v376 = vld [vmem:[#allocation2] sm:$0xff]
        %v377 = vld [vmem:[#allocation2 + $0x8] sm:$0xff]
        %v378 = vld [vmem:[#allocation5] sm:$0xff]
        %v379 = vld [vmem:[#allocation5 + $0x8] sm:$0xff]
        %v380 = vld [vmem:[%s3] sm:$0xff]
        %v381 = vld [vmem:[%s3 + $0x8] sm:$0xff]
        %383 = vset.pattern.permute.xlu0 0
        %384 = vperm.xlu0 %383, %v380
        %v385 = vpop.permute.xlu0 %384
        %388 = vset.pattern.permute.xlu0 0
        %389 = vperm.xlu0 %388, %v381
        %v390 = vpop.permute.xlu0 %389
        %vm392 = vcmask 392192
        %v394 = vsel %vm392, %v376, 0
        %v397 = vsel %vm392, %v377, 0
        %399 = vmatprep.subr.mxu0 0.0
        %v400 = vand.u32 %v360, 4294901760
        %401 = vmatpush1.msra.mxu0 %v400
        %402 = vmatprep.subr.mxu0 0.0
        %v403 = vand.u32 %v361, 4294901760
        %404 = vmatpush1.msra.mxu0 %v403
        %405 = vmatprep.subr.mxu0 0.0
        %v406 = vand.u32 %v365, 4294901760
        %407 = vmatpush1.msra.mxu0 %v406
        %408 = vmatprep.subr.mxu0 0.0
        %v409 = vand.u32 %v367, 4294901760
        %410 = vmatpush1.msra.mxu0 %v409
        %411 = vmatprep.subr.mxu0 0.0
        %v412 = vand.u32 %v371, 4294901760
        %413 = vmatpush1.msra.mxu0 %v412
        %414 = vmatprep.subr.mxu0 0.0
        %v415 = vand.u32 %v373, 4294901760
        %416 = vmatpush1.msra.mxu0 %v415
        %417 = vmatprep.subr.mxu0 0.0
        %418 = vmatpush1.msra.mxu0 0.0
        %419 = vmatprep.subr.mxu0 0.0
        %420 = vmatpush1.msra.mxu0 0.0
        %421 = vmatprep.subr.mxu0 0.0
        %422 = vmatpush1.msra.mxu0 0.0
        %423 = vmatprep.subr.mxu0 0.0
        %424 = vmatpush1.msra.mxu0 0.0
        %425 = vmatprep.subr.mxu0 0.0
        %426 = vmatpush1.msra.mxu0 0.0
        %427 = vmatprep.subr.mxu0 0.0
        %428 = vmatpush1.msra.mxu0 0.0
        %429 = vmatprep.subr.mxu0 0.0
        %430 = vmatpush1.msra.mxu0 0.0
        %431 = vmatprep.subr.mxu0 0.0
        %432 = vmatpush1.msra.mxu0 0.0
        %433 = vmatprep.subr.mxu0 0.0
        %434 = vmatpush1.msra.mxu0 0.0
        %435 = vmatprep.subr.mxu0 0.0
        %436 = vmatpush1.msra.mxu0 0.0
        %437 = vmatprep.subr.mxu0 0.0
        %438 = vmatpush1.msra.mxu0 0.0
        %439 = vmatprep.subr.mxu0 0.0
        %440 = vmatpush1.msra.mxu0 0.0
        %441 = vmatprep.subr.mxu0 0.0
        %442 = vmatpush1.msra.mxu0 0.0
        %443 = vmatprep.subr.mxu0 0.0
        %444 = vmatpush1.msra.mxu0 0.0
        %445 = vmatprep.subr.mxu0 0.0
        %446 = vmatpush1.msra.mxu0 0.0
        %447 = vmatprep.subr.mxu0 0.0
        %448 = vmatpush1.msra.mxu0 0.0
        %449 = vmatprep.subr.mxu0 0.0
        %450 = vmatpush1.msra.mxu0 0.0
        %451 = vmatprep.subr.mxu0 0.0
        %452 = vmatpush1.msra.mxu0 0.0
        %453 = vmatprep.subr.mxu0 0.0
        %454 = vmatpush1.msra.mxu0 0.0
        %455 = vmatprep.subr.mxu0 0.0
        %456 = vmatpush1.msra.mxu0 0.0
        %457 = vmatprep.subr.mxu0 0.0
        %458 = vmatpush1.msra.mxu0 0.0
        %459 = vmatprep.subr.mxu0 0.0
        %460 = vmatpush1.msra.mxu0 0.0
        %461 = vmatprep.subr.mxu0 0.0
        %462 = vmatpush1.msra.mxu0 0.0
        %463 = vmatprep.subr.mxu0 0.0
        %464 = vmatpush1.msra.mxu0 0.0
        %465 = vmatprep.subr.mxu0 0.0
        %466 = vmatpush1.msra.mxu0 0.0
        %467 = vmatprep.subr.mxu0 0.0
        %468 = vmatpush1.msra.mxu0 0.0
        %469 = vmatprep.mubr.f32.mxu0 0.0
        %v470 = vand.u32 %v394, 4294901760
        %v471 = vsub.f32 %v394, %v470
        %v472 = vand.u32 %v471, 4294901760
        %v473 = vsub.f32 %v471, %v472
        %v474 = vand.u32 %v473, 4294901760
        %475 = vmatmul.mubr.f32.gmra.mrb[0].mxu0 %v474
        %v476 = vpop.f32.mrb[0].mxu0
        %v477 = vadd.f32 %v385, %v476
        %v478 = vpop.f32.mrb[0].mxu0
        %479 = vmatprep.mubr.f32.mxu0 0.0
        %v480 = vand.u32 %v397, 4294901760
        %v481 = vsub.f32 %v397, %v480
        %v482 = vand.u32 %v481, 4294901760
        %v483 = vsub.f32 %v481, %v482
        %v484 = vand.u32 %v483, 4294901760
        %485 = vmatmul.mubr.f32.gmra.mrb[0].mxu0 %v484
        %v486 = vpop.f32.mrb[0].mxu0
        %v487 = vadd.f32 %v390, %v486
        %v488 = vpop.f32.mrb[0].mxu0
        %489 = vdwg.mxu0
        %490 = vmatprep.subr.mxu0 0.0
        %v491 = vand.u32 %v360, 4294901760
        %v492 = vsub.f32 %v360, %v491
        %v493 = vand.u32 %v492, 4294901760
        %v494 = vsub.f32 %v492, %v493
        %v495 = vand.u32 %v494, 4294901760
        %496 = vmatpush1.msra.mxu0 %v495
        %497 = vmatprep.subr.mxu0 0.0
        %v498 = vand.u32 %v361, 4294901760
        %v499 = vsub.f32 %v361, %v498
        %v500 = vand.u32 %v499, 4294901760
        %v501 = vsub.f32 %v499, %v500
        %v502 = vand.u32 %v501, 4294901760
        %503 = vmatpush1.msra.mxu0 %v502
        %504 = vmatprep.subr.mxu0 0.0
        %v505 = vand.u32 %v365, 4294901760
        %v506 = vsub.f32 %v365, %v505
        %v507 = vand.u32 %v506, 4294901760
        %v508 = vsub.f32 %v506, %v507
        %v509 = vand.u32 %v508, 4294901760
        %510 = vmatpush1.msra.mxu0 %v509
        %511 = vmatprep.subr.mxu0 0.0
        %v512 = vand.u32 %v367, 4294901760
        %v513 = vsub.f32 %v367, %v512
        %v514 = vand.u32 %v513, 4294901760
        %v515 = vsub.f32 %v513, %v514
        %v516 = vand.u32 %v515, 4294901760
        %517 = vmatpush1.msra.mxu0 %v516
        %518 = vmatprep.subr.mxu0 0.0
        %v519 = vand.u32 %v371, 4294901760
        %v520 = vsub.f32 %v371, %v519
        %v521 = vand.u32 %v520, 4294901760
        %v522 = vsub.f32 %v520, %v521
        %v523 = vand.u32 %v522, 4294901760
        %524 = vmatpush1.msra.mxu0 %v523
        %525 = vmatprep.subr.mxu0 0.0
        %v526 = vand.u32 %v373, 4294901760
        %v527 = vsub.f32 %v373, %v526
        %v528 = vand.u32 %v527, 4294901760
        %v529 = vsub.f32 %v527, %v528
        %v530 = vand.u32 %v529, 4294901760
        %531 = vmatpush1.msra.mxu0 %v530
        %532 = vmatprep.subr.mxu0 0.0
        %533 = vmatpush1.msra.mxu0 0.0
        %534 = vmatprep.subr.mxu0 0.0
        %535 = vmatpush1.msra.mxu0 0.0
        %536 = vmatprep.subr.mxu0 0.0
        %537 = vmatpush1.msra.mxu0 0.0
        %538 = vmatprep.subr.mxu0 0.0
        %539 = vmatpush1.msra.mxu0 0.0
        %540 = vmatprep.subr.mxu0 0.0
        %541 = vmatpush1.msra.mxu0 0.0
        %542 = vmatprep.subr.mxu0 0.0
        %543 = vmatpush1.msra.mxu0 0.0
        %544 = vmatprep.subr.mxu0 0.0
        %545 = vmatpush1.msra.mxu0 0.0
        %546 = vmatprep.subr.mxu0 0.0
        %547 = vmatpush1.msra.mxu0 0.0
        %548 = vmatprep.subr.mxu0 0.0
        %549 = vmatpush1.msra.mxu0 0.0
        %550 = vmatprep.subr.mxu0 0.0
        %551 = vmatpush1.msra.mxu0 0.0
        %552 = vmatprep.subr.mxu0 0.0
        %553 = vmatpush1.msra.mxu0 0.0
        %554 = vmatprep.subr.mxu0 0.0
        %555 = vmatpush1.msra.mxu0 0.0
        %556 = vmatprep.subr.mxu0 0.0
        %557 = vmatpush1.msra.mxu0 0.0
        %558 = vmatprep.subr.mxu0 0.0
        %559 = vmatpush1.msra.mxu0 0.0
        %560 = vmatprep.subr.mxu0 0.0
        %561 = vmatpush1.msra.mxu0 0.0
        %562 = vmatprep.subr.mxu0 0.0
        %563 = vmatpush1.msra.mxu0 0.0
        %564 = vmatprep.subr.mxu0 0.0
        %565 = vmatpush1.msra.mxu0 0.0
        %566 = vmatprep.subr.mxu0 0.0
        %567 = vmatpush1.msra.mxu0 0.0
        %568 = vmatprep.subr.mxu0 0.0
        %569 = vmatpush1.msra.mxu0 0.0
        %570 = vmatprep.subr.mxu0 0.0
        %571 = vmatpush1.msra.mxu0 0.0
        %572 = vmatprep.subr.mxu0 0.0
        %573 = vmatpush1.msra.mxu0 0.0
        %574 = vmatprep.subr.mxu0 0.0
        %575 = vmatpush1.msra.mxu0 0.0
        %576 = vmatprep.subr.mxu0 0.0
        %577 = vmatpush1.msra.mxu0 0.0
        %578 = vmatprep.subr.mxu0 0.0
        %579 = vmatpush1.msra.mxu0 0.0
        %580 = vmatprep.subr.mxu0 0.0
        %581 = vmatpush1.msra.mxu0 0.0
        %582 = vmatprep.subr.mxu0 0.0
        %583 = vmatpush1.msra.mxu0 0.0
        %584 = vmatprep.mubr.f32.mxu0 0.0
        %v585 = vand.u32 %v394, 4294901760
        %586 = vmatmul.mubr.f32.gmra.mrb[0].mxu0 %v585
        %v587 = vpop.f32.mrb[0].mxu0
        %v588 = vadd.f32 %v477, %v587
        %v589 = vpop.f32.mrb[0].mxu0
        %590 = vmatprep.mubr.f32.mxu0 0.0
        %v591 = vand.u32 %v397, 4294901760
        %592 = vmatmul.mubr.f32.gmra.mrb[0].mxu0 %v591
        %v593 = vpop.f32.mrb[0].mxu0
        %v594 = vadd.f32 %v487, %v593
        %v595 = vpop.f32.mrb[0].mxu0
        %596 = vdwg.mxu0
        %597 = vmatprep.subr.mxu0 0.0
        %v598 = vand.u32 %v360, 4294901760
        %v599 = vsub.f32 %v360, %v598
        %600 = vmatpush1.msra.mxu0 %v599
        %601 = vmatprep.subr.mxu0 0.0
        %v602 = vand.u32 %v361, 4294901760
        %v603 = vsub.f32 %v361, %v602
        %604 = vmatpush1.msra.mxu0 %v603
        %605 = vmatprep.subr.mxu0 0.0
        %v606 = vand.u32 %v365, 4294901760
        %v607 = vsub.f32 %v365, %v606
        %608 = vmatpush1.msra.mxu0 %v607
        %609 = vmatprep.subr.mxu0 0.0
        %v610 = vand.u32 %v367, 4294901760
        %v611 = vsub.f32 %v367, %v610
        %612 = vmatpush1.msra.mxu0 %v611
        %613 = vmatprep.subr.mxu0 0.0
        %v614 = vand.u32 %v371, 4294901760
        %v615 = vsub.f32 %v371, %v614
        %616 = vmatpush1.msra.mxu0 %v615
        %617 = vmatprep.subr.mxu0 0.0
        %v618 = vand.u32 %v373, 4294901760
        %v619 = vsub.f32 %v373, %v618
        %620 = vmatpush1.msra.mxu0 %v619
        %621 = vmatprep.subr.mxu0 0.0
        %622 = vmatpush1.msra.mxu0 0.0
        %623 = vmatprep.subr.mxu0 0.0
        %624 = vmatpush1.msra.mxu0 0.0
        %625 = vmatprep.subr.mxu0 0.0
        %626 = vmatpush1.msra.mxu0 0.0
        %627 = vmatprep.subr.mxu0 0.0
        %628 = vmatpush1.msra.mxu0 0.0
        %629 = vmatprep.subr.mxu0 0.0
        %630 = vmatpush1.msra.mxu0 0.0
        %631 = vmatprep.subr.mxu0 0.0
        %632 = vmatpush1.msra.mxu0 0.0
        %633 = vmatprep.subr.mxu0 0.0
        %634 = vmatpush1.msra.mxu0 0.0
        %635 = vmatprep.subr.mxu0 0.0
        %636 = vmatpush1.msra.mxu0 0.0
        %637 = vmatprep.subr.mxu0 0.0
        %638 = vmatpush1.msra.mxu0 0.0
        %639 = vmatprep.subr.mxu0 0.0
        %640 = vmatpush1.msra.mxu0 0.0
        %641 = vmatprep.subr.mxu0 0.0
        %642 = vmatpush1.msra.mxu0 0.0
        %643 = vmatprep.subr.mxu0 0.0
        %644 = vmatpush1.msra.mxu0 0.0
        %645 = vmatprep.subr.mxu0 0.0
        %646 = vmatpush1.msra.mxu0 0.0
        %647 = vmatprep.subr.mxu0 0.0
        %648 = vmatpush1.msra.mxu0 0.0
        %649 = vmatprep.subr.mxu0 0.0
        %650 = vmatpush1.msra.mxu0 0.0
        %651 = vmatprep.subr.mxu0 0.0
        %652 = vmatpush1.msra.mxu0 0.0
        %653 = vmatprep.subr.mxu0 0.0
        %654 = vmatpush1.msra.mxu0 0.0
        %655 = vmatprep.subr.mxu0 0.0
        %656 = vmatpush1.msra.mxu0 0.0
        %657 = vmatprep.subr.mxu0 0.0
        %658 = vmatpush1.msra.mxu0 0.0
        %659 = vmatprep.subr.mxu0 0.0
        %660 = vmatpush1.msra.mxu0 0.0
        %661 = vmatprep.subr.mxu0 0.0
        %662 = vmatpush1.msra.mxu0 0.0
        %663 = vmatprep.subr.mxu0 0.0
        %664 = vmatpush1.msra.mxu0 0.0
        %665 = vmatprep.subr.mxu0 0.0
        %666 = vmatpush1.msra.mxu0 0.0
        %667 = vmatprep.subr.mxu0 0.0
        %668 = vmatpush1.msra.mxu0 0.0
        %669 = vmatprep.subr.mxu0 0.0
        %670 = vmatpush1.msra.mxu0 0.0
        %671 = vmatprep.subr.mxu0 0.0
        %672 = vmatpush1.msra.mxu0 0.0
        %673 = vmatprep.mubr.f32.mxu0 0.0
        %v674 = vand.u32 %v394, 4294901760
        %v675 = vsub.f32 %v394, %v674
        %676 = vmatmul.mubr.f32.gmra.mrb[0].mxu0 %v675
        %v677 = vpop.f32.mrb[0].mxu0
        %v678 = vadd.f32 %v588, %v677
        %v679 = vpop.f32.mrb[0].mxu0
        %680 = vmatprep.mubr.f32.mxu0 0.0
        %v681 = vand.u32 %v397, 4294901760
        %v682 = vsub.f32 %v397, %v681
        %683 = vmatmul.mubr.f32.gmra.mrb[0].mxu0 %v682
        %v684 = vpop.f32.mrb[0].mxu0
        %v685 = vadd.f32 %v594, %v684
        %v686 = vpop.f32.mrb[0].mxu0
        %687 = vdwg.mxu0
        %688 = vmatprep.subr.mxu0 0.0
        %v689 = vand.u32 %v360, 4294901760
        %690 = vmatpush1.msra.mxu0 %v689
        %691 = vmatprep.subr.mxu0 0.0
        %v692 = vand.u32 %v361, 4294901760
        %693 = vmatpush1.msra.mxu0 %v692
        %694 = vmatprep.subr.mxu0 0.0
        %v695 = vand.u32 %v365, 4294901760
        %696 = vmatpush1.msra.mxu0 %v695
        %697 = vmatprep.subr.mxu0 0.0
        %v698 = vand.u32 %v367, 4294901760
        %699 = vmatpush1.msra.mxu0 %v698
        %700 = vmatprep.subr.mxu0 0.0
        %v701 = vand.u32 %v371, 4294901760
        %702 = vmatpush1.msra.mxu0 %v701
        %703 = vmatprep.subr.mxu0 0.0
        %v704 = vand.u32 %v373, 4294901760
        %705 = vmatpush1.msra.mxu0 %v704
        %706 = vmatprep.subr.mxu0 0.0
        %707 = vmatpush1.msra.mxu0 0.0
        %708 = vmatprep.subr.mxu0 0.0
        %709 = vmatpush1.msra.mxu0 0.0
        %710 = vmatprep.subr.mxu0 0.0
        %711 = vmatpush1.msra.mxu0 0.0
        %712 = vmatprep.subr.mxu0 0.0
        %713 = vmatpush1.msra.mxu0 0.0
        %714 = vmatprep.subr.mxu0 0.0
        %715 = vmatpush1.msra.mxu0 0.0
        %716 = vmatprep.subr.mxu0 0.0
        %717 = vmatpush1.msra.mxu0 0.0
        %718 = vmatprep.subr.mxu0 0.0
        %719 = vmatpush1.msra.mxu0 0.0
        %720 = vmatprep.subr.mxu0 0.0
        %721 = vmatpush1.msra.mxu0 0.0
        %722 = vmatprep.subr.mxu0 0.0
        %723 = vmatpush1.msra.mxu0 0.0
        %724 = vmatprep.subr.mxu0 0.0
        %725 = vmatpush1.msra.mxu0 0.0
        %726 = vmatprep.subr.mxu0 0.0
        %727 = vmatpush1.msra.mxu0 0.0
        %728 = vmatprep.subr.mxu0 0.0
        %729 = vmatpush1.msra.mxu0 0.0
        %730 = vmatprep.subr.mxu0 0.0
        %731 = vmatpush1.msra.mxu0 0.0
        %732 = vmatprep.subr.mxu0 0.0
        %733 = vmatpush1.msra.mxu0 0.0
        %734 = vmatprep.subr.mxu0 0.0
        %735 = vmatpush1.msra.mxu0 0.0
        %736 = vmatprep.subr.mxu0 0.0
        %737 = vmatpush1.msra.mxu0 0.0
        %738 = vmatprep.subr.mxu0 0.0
        %739 = vmatpush1.msra.mxu0 0.0
        %740 = vmatprep.subr.mxu0 0.0
        %741 = vmatpush1.msra.mxu0 0.0
        %742 = vmatprep.subr.mxu0 0.0
        %743 = vmatpush1.msra.mxu0 0.0
        %744 = vmatprep.subr.mxu0 0.0
        %745 = vmatpush1.msra.mxu0 0.0
        %746 = vmatprep.subr.mxu0 0.0
        %747 = vmatpush1.msra.mxu0 0.0
        %748 = vmatprep.subr.mxu0 0.0
        %749 = vmatpush1.msra.mxu0 0.0
        %750 = vmatprep.subr.mxu0 0.0
        %751 = vmatpush1.msra.mxu0 0.0
        %752 = vmatprep.subr.mxu0 0.0
        %753 = vmatpush1.msra.mxu0 0.0
        %754 = vmatprep.subr.mxu0 0.0
        %755 = vmatpush1.msra.mxu0 0.0
        %756 = vmatprep.subr.mxu0 0.0
        %757 = vmatpush1.msra.mxu0 0.0
        %758 = vmatprep.mubr.f32.mxu0 0.0
        %v759 = vand.u32 %v394, 4294901760
        %v760 = vsub.f32 %v394, %v759
        %v761 = vand.u32 %v760, 4294901760
        %762 = vmatmul.mubr.f32.gmra.mrb[0].mxu0 %v761
        %v763 = vpop.f32.mrb[0].mxu0
        %v764 = vadd.f32 %v678, %v763
        %v765 = vpop.f32.mrb[0].mxu0
        %766 = vmatprep.mubr.f32.mxu0 0.0
        %v767 = vand.u32 %v397, 4294901760
        %v768 = vsub.f32 %v397, %v767
        %v769 = vand.u32 %v768, 4294901760
        %770 = vmatmul.mubr.f32.gmra.mrb[0].mxu0 %v769
        %v771 = vpop.f32.mrb[0].mxu0
        %v772 = vadd.f32 %v685, %v771
        %v773 = vpop.f32.mrb[0].mxu0
        %774 = vdwg.mxu0
        %775 = vmatprep.subr.mxu0 0.0
        %v776 = vand.u32 %v360, 4294901760
        %v777 = vsub.f32 %v360, %v776
        %v778 = vand.u32 %v777, 4294901760
        %779 = vmatpush1.msra.mxu0 %v778
        %780 = vmatprep.subr.mxu0 0.0
        %v781 = vand.u32 %v361, 4294901760
        %v782 = vsub.f32 %v361, %v781
        %v783 = vand.u32 %v782, 4294901760
        %784 = vmatpush1.msra.mxu0 %v783
        %785 = vmatprep.subr.mxu0 0.0
        %v786 = vand.u32 %v365, 4294901760
        %v787 = vsub.f32 %v365, %v786
        %v788 = vand.u32 %v787, 4294901760
        %789 = vmatpush1.msra.mxu0 %v788
        %790 = vmatprep.subr.mxu0 0.0
        %v791 = vand.u32 %v367, 4294901760
        %v792 = vsub.f32 %v367, %v791
        %v793 = vand.u32 %v792, 4294901760
        %794 = vmatpush1.msra.mxu0 %v793
        %795 = vmatprep.subr.mxu0 0.0
        %v796 = vand.u32 %v371, 4294901760
        %v797 = vsub.f32 %v371, %v796
        %v798 = vand.u32 %v797, 4294901760
        %799 = vmatpush1.msra.mxu0 %v798
        %800 = vmatprep.subr.mxu0 0.0
        %v801 = vand.u32 %v373, 4294901760
        %v802 = vsub.f32 %v373, %v801
        %v803 = vand.u32 %v802, 4294901760
        %804 = vmatpush1.msra.mxu0 %v803
        %805 = vmatprep.subr.mxu0 0.0
        %806 = vmatpush1.msra.mxu0 0.0
        %807 = vmatprep.subr.mxu0 0.0
        %808 = vmatpush1.msra.mxu0 0.0
        %809 = vmatprep.subr.mxu0 0.0
        %810 = vmatpush1.msra.mxu0 0.0
        %811 = vmatprep.subr.mxu0 0.0
        %812 = vmatpush1.msra.mxu0 0.0
        %813 = vmatprep.subr.mxu0 0.0
        %814 = vmatpush1.msra.mxu0 0.0
        %815 = vmatprep.subr.mxu0 0.0
        %816 = vmatpush1.msra.mxu0 0.0
        %817 = vmatprep.subr.mxu0 0.0
        %818 = vmatpush1.msra.mxu0 0.0
        %819 = vmatprep.subr.mxu0 0.0
        %820 = vmatpush1.msra.mxu0 0.0
        %821 = vmatprep.subr.mxu0 0.0
        %822 = vmatpush1.msra.mxu0 0.0
        %823 = vmatprep.subr.mxu0 0.0
        %824 = vmatpush1.msra.mxu0 0.0
        %825 = vmatprep.subr.mxu0 0.0
        %826 = vmatpush1.msra.mxu0 0.0
        %827 = vmatprep.subr.mxu0 0.0
        %828 = vmatpush1.msra.mxu0 0.0
        %829 = vmatprep.subr.mxu0 0.0
        %830 = vmatpush1.msra.mxu0 0.0
        %831 = vmatprep.subr.mxu0 0.0
        %832 = vmatpush1.msra.mxu0 0.0
        %833 = vmatprep.subr.mxu0 0.0
        %834 = vmatpush1.msra.mxu0 0.0
        %835 = vmatprep.subr.mxu0 0.0
        %836 = vmatpush1.msra.mxu0 0.0
        %837 = vmatprep.subr.mxu0 0.0
        %838 = vmatpush1.msra.mxu0 0.0
        %839 = vmatprep.subr.mxu0 0.0
        %840 = vmatpush1.msra.mxu0 0.0
        %841 = vmatprep.subr.mxu0 0.0
        %842 = vmatpush1.msra.mxu0 0.0
        %843 = vmatprep.subr.mxu0 0.0
        %844 = vmatpush1.msra.mxu0 0.0
        %845 = vmatprep.subr.mxu0 0.0
        %846 = vmatpush1.msra.mxu0 0.0
        %847 = vmatprep.subr.mxu0 0.0
        %848 = vmatpush1.msra.mxu0 0.0
        %849 = vmatprep.subr.mxu0 0.0
        %850 = vmatpush1.msra.mxu0 0.0
        %851 = vmatprep.subr.mxu0 0.0
        %852 = vmatpush1.msra.mxu0 0.0
        %853 = vmatprep.subr.mxu0 0.0
        %854 = vmatpush1.msra.mxu0 0.0
        %855 = vmatprep.subr.mxu0 0.0
        %856 = vmatpush1.msra.mxu0 0.0
        %857 = vmatprep.mubr.f32.mxu0 0.0
        %v858 = vand.u32 %v394, 4294901760
        %859 = vmatmul.mubr.f32.gmra.mrb[0].mxu0 %v858
        %v860 = vpop.f32.mrb[0].mxu0
        %v861 = vadd.f32 %v764, %v860
        %v862 = vpop.f32.mrb[0].mxu0
        %863 = vmatprep.mubr.f32.mxu0 0.0
        %v864 = vand.u32 %v397, 4294901760
        %865 = vmatmul.mubr.f32.gmra.mrb[0].mxu0 %v864
        %v866 = vpop.f32.mrb[0].mxu0
        %v867 = vadd.f32 %v772, %v866
        %v868 = vpop.f32.mrb[0].mxu0
        %869 = vdwg.mxu0
        %870 = vmatprep.subr.mxu0 0.0
        %v871 = vand.u32 %v360, 4294901760
        %872 = vmatpush1.msra.mxu0 %v871
        %873 = vmatprep.subr.mxu0 0.0
        %v874 = vand.u32 %v361, 4294901760
        %875 = vmatpush1.msra.mxu0 %v874
        %876 = vmatprep.subr.mxu0 0.0
        %v877 = vand.u32 %v365, 4294901760
        %878 = vmatpush1.msra.mxu0 %v877
        %879 = vmatprep.subr.mxu0 0.0
        %v880 = vand.u32 %v367, 4294901760
        %881 = vmatpush1.msra.mxu0 %v880
        %882 = vmatprep.subr.mxu0 0.0
        %v883 = vand.u32 %v371, 4294901760
        %884 = vmatpush1.msra.mxu0 %v883
        %885 = vmatprep.subr.mxu0 0.0
        %v886 = vand.u32 %v373, 4294901760
        %887 = vmatpush1.msra.mxu0 %v886
        %888 = vmatprep.subr.mxu0 0.0
        %889 = vmatpush1.msra.mxu0 0.0
        %890 = vmatprep.subr.mxu0 0.0
        %891 = vmatpush1.msra.mxu0 0.0
        %892 = vmatprep.subr.mxu0 0.0
        %893 = vmatpush1.msra.mxu0 0.0
        %894 = vmatprep.subr.mxu0 0.0
        %895 = vmatpush1.msra.mxu0 0.0
        %896 = vmatprep.subr.mxu0 0.0
        %897 = vmatpush1.msra.mxu0 0.0
        %898 = vmatprep.subr.mxu0 0.0
        %899 = vmatpush1.msra.mxu0 0.0
        %900 = vmatprep.subr.mxu0 0.0
        %901 = vmatpush1.msra.mxu0 0.0
        %902 = vmatprep.subr.mxu0 0.0
        %903 = vmatpush1.msra.mxu0 0.0
        %904 = vmatprep.subr.mxu0 0.0
        %905 = vmatpush1.msra.mxu0 0.0
        %906 = vmatprep.subr.mxu0 0.0
        %907 = vmatpush1.msra.mxu0 0.0
        %908 = vmatprep.subr.mxu0 0.0
        %909 = vmatpush1.msra.mxu0 0.0
        %910 = vmatprep.subr.mxu0 0.0
        %911 = vmatpush1.msra.mxu0 0.0
        %912 = vmatprep.subr.mxu0 0.0
        %913 = vmatpush1.msra.mxu0 0.0
        %914 = vmatprep.subr.mxu0 0.0
        %915 = vmatpush1.msra.mxu0 0.0
        %916 = vmatprep.subr.mxu0 0.0
        %917 = vmatpush1.msra.mxu0 0.0
        %918 = vmatprep.subr.mxu0 0.0
        %919 = vmatpush1.msra.mxu0 0.0
        %920 = vmatprep.subr.mxu0 0.0
        %921 = vmatpush1.msra.mxu0 0.0
        %922 = vmatprep.subr.mxu0 0.0
        %923 = vmatpush1.msra.mxu0 0.0
        %924 = vmatprep.subr.mxu0 0.0
        %925 = vmatpush1.msra.mxu0 0.0
        %926 = vmatprep.subr.mxu0 0.0
        %927 = vmatpush1.msra.mxu0 0.0
        %928 = vmatprep.subr.mxu0 0.0
        %929 = vmatpush1.msra.mxu0 0.0
        %930 = vmatprep.subr.mxu0 0.0
        %931 = vmatpush1.msra.mxu0 0.0
        %932 = vmatprep.subr.mxu0 0.0
        %933 = vmatpush1.msra.mxu0 0.0
        %934 = vmatprep.subr.mxu0 0.0
        %935 = vmatpush1.msra.mxu0 0.0
        %936 = vmatprep.subr.mxu0 0.0
        %937 = vmatpush1.msra.mxu0 0.0
        %938 = vmatprep.subr.mxu0 0.0
        %939 = vmatpush1.msra.mxu0 0.0
        %940 = vmatprep.mubr.f32.mxu0 0.0
        %v941 = vand.u32 %v394, 4294901760
        %942 = vmatmul.mubr.f32.gmra.mrb[0].mxu0 %v941
        %v943 = vpop.f32.mrb[0].mxu0
        %v944 = vadd.f32 %v861, %v943
        %v945 = vpop.f32.mrb[0].mxu0
        %946 = vmatprep.mubr.f32.mxu0 0.0
        %v947 = vand.u32 %v397, 4294901760
        %948 = vmatmul.mubr.f32.gmra.mrb[0].mxu0 %v947
        %v949 = vpop.f32.mrb[0].mxu0
        %v950 = vadd.f32 %v867, %v949
        %v951 = vpop.f32.mrb[0].mxu0
        %952 = vdwg.mxu0
        %v953 = vld [vmem:[%s4] sm:$0xff]
        %v954 = vld [vmem:[%s4 + $0x8] sm:$0xff]
        %956 = vset.pattern.permute.xlu0 0
        %957 = vperm.xlu0 %956, %v953
        %v958 = vpop.permute.xlu0 %957
        %961 = vset.pattern.permute.xlu0 0
        %962 = vperm.xlu0 %961, %v954
        %v963 = vpop.permute.xlu0 %962
        %v966 = vsel %vm392, %v378, 0
        %v969 = vsel %vm392, %v379, 0
        %971 = vmatprep.subr.mxu0 0.0
        %v972 = vand.u32 %v360, 4294901760
        %973 = vmatpush1.msra.mxu0 %v972
        %974 = vmatprep.subr.mxu0 0.0
        %v975 = vand.u32 %v361, 4294901760
        %976 = vmatpush1.msra.mxu0 %v975
        %977 = vmatprep.subr.mxu0 0.0
        %v978 = vand.u32 %v365, 4294901760
        %979 = vmatpush1.msra.mxu0 %v978
        %980 = vmatprep.subr.mxu0 0.0
        %v981 = vand.u32 %v367, 4294901760
        %982 = vmatpush1.msra.mxu0 %v981
        %983 = vmatprep.subr.mxu0 0.0
        %v984 = vand.u32 %v371, 4294901760
        %985 = vmatpush1.msra.mxu0 %v984
        %986 = vmatprep.subr.mxu0 0.0
        %v987 = vand.u32 %v373, 4294901760
        %988 = vmatpush1.msra.mxu0 %v987
        %989 = vmatprep.subr.mxu0 0.0
        %990 = vmatpush1.msra.mxu0 0.0
        %991 = vmatprep.subr.mxu0 0.0
        %992 = vmatpush1.msra.mxu0 0.0
        %993 = vmatprep.subr.mxu0 0.0
        %994 = vmatpush1.msra.mxu0 0.0
        %995 = vmatprep.subr.mxu0 0.0
        %996 = vmatpush1.msra.mxu0 0.0
        %997 = vmatprep.subr.mxu0 0.0
        %998 = vmatpush1.msra.mxu0 0.0
        %999 = vmatprep.subr.mxu0 0.0
        %1000 = vmatpush1.msra.mxu0 0.0
        %1001 = vmatprep.subr.mxu0 0.0
        %1002 = vmatpush1.msra.mxu0 0.0
        %1003 = vmatprep.subr.mxu0 0.0
        %1004 = vmatpush1.msra.mxu0 0.0
        %1005 = vmatprep.subr.mxu0 0.0
        %1006 = vmatpush1.msra.mxu0 0.0
        %1007 = vmatprep.subr.mxu0 0.0
        %1008 = vmatpush1.msra.mxu0 0.0
        %1009 = vmatprep.subr.mxu0 0.0
        %1010 = vmatpush1.msra.mxu0 0.0
        %1011 = vmatprep.subr.mxu0 0.0
        %1012 = vmatpush1.msra.mxu0 0.0
        %1013 = vmatprep.subr.mxu0 0.0
        %1014 = vmatpush1.msra.mxu0 0.0
        %1015 = vmatprep.subr.mxu0 0.0
        %1016 = vmatpush1.msra.mxu0 0.0
        %1017 = vmatprep.subr.mxu0 0.0
        %1018 = vmatpush1.msra.mxu0 0.0
        %1019 = vmatprep.subr.mxu0 0.0
        %1020 = vmatpush1.msra.mxu0 0.0
        %1021 = vmatprep.subr.mxu0 0.0
        %1022 = vmatpush1.msra.mxu0 0.0
        %1023 = vmatprep.subr.mxu0 0.0
        %1024 = vmatpush1.msra.mxu0 0.0
        %1025 = vmatprep.subr.mxu0 0.0
        %1026 = vmatpush1.msra.mxu0 0.0
        %1027 = vmatprep.subr.mxu0 0.0
        %1028 = vmatpush1.msra.mxu0 0.0
        %1029 = vmatprep.subr.mxu0 0.0
        %1030 = vmatpush1.msra.mxu0 0.0
        %1031 = vmatprep.subr.mxu0 0.0
        %1032 = vmatpush1.msra.mxu0 0.0
        %1033 = vmatprep.subr.mxu0 0.0
        %1034 = vmatpush1.msra.mxu0 0.0
        %1035 = vmatprep.subr.mxu0 0.0
        %1036 = vmatpush1.msra.mxu0 0.0
        %1037 = vmatprep.subr.mxu0 0.0
        %1038 = vmatpush1.msra.mxu0 0.0
        %1039 = vmatprep.subr.mxu0 0.0
        %1040 = vmatpush1.msra.mxu0 0.0
        %1041 = vmatprep.mubr.f32.mxu0 0.0
        %v1042 = vand.u32 %v966, 4294901760
        %v1043 = vsub.f32 %v966, %v1042
        %v1044 = vand.u32 %v1043, 4294901760
        %v1045 = vsub.f32 %v1043, %v1044
        %v1046 = vand.u32 %v1045, 4294901760
        %1047 = vmatmul.mubr.f32.gmra.mrb[0].mxu0 %v1046
        %v1048 = vpop.f32.mrb[0].mxu0
        %v1049 = vadd.f32 %v958, %v1048
        %v1050 = vpop.f32.mrb[0].mxu0
        %1051 = vmatprep.mubr.f32.mxu0 0.0
        %v1052 = vand.u32 %v969, 4294901760
        %v1053 = vsub.f32 %v969, %v1052
        %v1054 = vand.u32 %v1053, 4294901760
        %v1055 = vsub.f32 %v1053, %v1054
        %v1056 = vand.u32 %v1055, 4294901760
        %1057 = vmatmul.mubr.f32.gmra.mrb[0].mxu0 %v1056
        %v1058 = vpop.f32.mrb[0].mxu0
        %v1059 = vadd.f32 %v963, %v1058
        %v1060 = vpop.f32.mrb[0].mxu0
        %1061 = vdwg.mxu0
        %1062 = vmatprep.subr.mxu0 0.0
        %v1063 = vand.u32 %v360, 4294901760
        %v1064 = vsub.f32 %v360, %v1063
        %v1065 = vand.u32 %v1064, 4294901760
        %v1066 = vsub.f32 %v1064, %v1065
        %v1067 = vand.u32 %v1066, 4294901760
        %1068 = vmatpush1.msra.mxu0 %v1067
        %1069 = vmatprep.subr.mxu0 0.0
        %v1070 = vand.u32 %v361, 4294901760
        %v1071 = vsub.f32 %v361, %v1070
        %v1072 = vand.u32 %v1071, 4294901760
        %v1073 = vsub.f32 %v1071, %v1072
        %v1074 = vand.u32 %v1073, 4294901760
        %1075 = vmatpush1.msra.mxu0 %v1074
        %1076 = vmatprep.subr.mxu0 0.0
        %v1077 = vand.u32 %v365, 4294901760
        %v1078 = vsub.f32 %v365, %v1077
        %v1079 = vand.u32 %v1078, 4294901760
        %v1080 = vsub.f32 %v1078, %v1079
        %v1081 = vand.u32 %v1080, 4294901760
        %1082 = vmatpush1.msra.mxu0 %v1081
        %1083 = vmatprep.subr.mxu0 0.0
        %v1084 = vand.u32 %v367, 4294901760
        %v1085 = vsub.f32 %v367, %v1084
        %v1086 = vand.u32 %v1085, 4294901760
        %v1087 = vsub.f32 %v1085, %v1086
        %v1088 = vand.u32 %v1087, 4294901760
        %1089 = vmatpush1.msra.mxu0 %v1088
        %1090 = vmatprep.subr.mxu0 0.0
        %v1091 = vand.u32 %v371, 4294901760
        %v1092 = vsub.f32 %v371, %v1091
        %v1093 = vand.u32 %v1092, 4294901760
        %v1094 = vsub.f32 %v1092, %v1093
        %v1095 = vand.u32 %v1094, 4294901760
        %1096 = vmatpush1.msra.mxu0 %v1095
        %1097 = vmatprep.subr.mxu0 0.0
        %v1098 = vand.u32 %v373, 4294901760
        %v1099 = vsub.f32 %v373, %v1098
        %v1100 = vand.u32 %v1099, 4294901760
        %v1101 = vsub.f32 %v1099, %v1100
        %v1102 = vand.u32 %v1101, 4294901760
        %1103 = vmatpush1.msra.mxu0 %v1102
        %1104 = vmatprep.subr.mxu0 0.0
        %1105 = vmatpush1.msra.mxu0 0.0
        %1106 = vmatprep.subr.mxu0 0.0
        %1107 = vmatpush1.msra.mxu0 0.0
        %1108 = vmatprep.subr.mxu0 0.0
        %1109 = vmatpush1.msra.mxu0 0.0
        %1110 = vmatprep.subr.mxu0 0.0
        %1111 = vmatpush1.msra.mxu0 0.0
        %1112 = vmatprep.subr.mxu0 0.0
        %1113 = vmatpush1.msra.mxu0 0.0
        %1114 = vmatprep.subr.mxu0 0.0
        %1115 = vmatpush1.msra.mxu0 0.0
        %1116 = vmatprep.subr.mxu0 0.0
        %1117 = vmatpush1.msra.mxu0 0.0
        %1118 = vmatprep.subr.mxu0 0.0
        %1119 = vmatpush1.msra.mxu0 0.0
        %1120 = vmatprep.subr.mxu0 0.0
        %1121 = vmatpush1.msra.mxu0 0.0
        %1122 = vmatprep.subr.mxu0 0.0
        %1123 = vmatpush1.msra.mxu0 0.0
        %1124 = vmatprep.subr.mxu0 0.0
        %1125 = vmatpush1.msra.mxu0 0.0
        %1126 = vmatprep.subr.mxu0 0.0
        %1127 = vmatpush1.msra.mxu0 0.0
        %1128 = vmatprep.subr.mxu0 0.0
        %1129 = vmatpush1.msra.mxu0 0.0
        %1130 = vmatprep.subr.mxu0 0.0
        %1131 = vmatpush1.msra.mxu0 0.0
        %1132 = vmatprep.subr.mxu0 0.0
        %1133 = vmatpush1.msra.mxu0 0.0
        %1134 = vmatprep.subr.mxu0 0.0
        %1135 = vmatpush1.msra.mxu0 0.0
        %1136 = vmatprep.subr.mxu0 0.0
        %1137 = vmatpush1.msra.mxu0 0.0
        %1138 = vmatprep.subr.mxu0 0.0
        %1139 = vmatpush1.msra.mxu0 0.0
        %1140 = vmatprep.subr.mxu0 0.0
        %1141 = vmatpush1.msra.mxu0 0.0
        %1142 = vmatprep.subr.mxu0 0.0
        %1143 = vmatpush1.msra.mxu0 0.0
        %1144 = vmatprep.subr.mxu0 0.0
        %1145 = vmatpush1.msra.mxu0 0.0
        %1146 = vmatprep.subr.mxu0 0.0
        %1147 = vmatpush1.msra.mxu0 0.0
        %1148 = vmatprep.subr.mxu0 0.0
        %1149 = vmatpush1.msra.mxu0 0.0
        %1150 = vmatprep.subr.mxu0 0.0
        %1151 = vmatpush1.msra.mxu0 0.0
        %1152 = vmatprep.subr.mxu0 0.0
        %1153 = vmatpush1.msra.mxu0 0.0
        %1154 = vmatprep.subr.mxu0 0.0
        %1155 = vmatpush1.msra.mxu0 0.0
        %1156 = vmatprep.mubr.f32.mxu0 0.0
        %v1157 = vand.u32 %v966, 4294901760
        %1158 = vmatmul.mubr.f32.gmra.mrb[0].mxu0 %v1157
        %v1159 = vpop.f32.mrb[0].mxu0
        %v1160 = vadd.f32 %v1049, %v1159
        %v1161 = vpop.f32.mrb[0].mxu0
        %1162 = vmatprep.mubr.f32.mxu0 0.0
        %v1163 = vand.u32 %v969, 4294901760
        %1164 = vmatmul.mubr.f32.gmra.mrb[0].mxu0 %v1163
        %v1165 = vpop.f32.mrb[0].mxu0
        %v1166 = vadd.f32 %v1059, %v1165
        %v1167 = vpop.f32.mrb[0].mxu0
        %1168 = vdwg.mxu0
        %1169 = vmatprep.subr.mxu0 0.0
        %v1170 = vand.u32 %v360, 4294901760
        %v1171 = vsub.f32 %v360, %v1170
        %1172 = vmatpush1.msra.mxu0 %v1171
        %1173 = vmatprep.subr.mxu0 0.0
        %v1174 = vand.u32 %v361, 4294901760
        %v1175 = vsub.f32 %v361, %v1174
        %1176 = vmatpush1.msra.mxu0 %v1175
        %1177 = vmatprep.subr.mxu0 0.0
        %v1178 = vand.u32 %v365, 4294901760
        %v1179 = vsub.f32 %v365, %v1178
        %1180 = vmatpush1.msra.mxu0 %v1179
        %1181 = vmatprep.subr.mxu0 0.0
        %v1182 = vand.u32 %v367, 4294901760
        %v1183 = vsub.f32 %v367, %v1182
        %1184 = vmatpush1.msra.mxu0 %v1183
        %1185 = vmatprep.subr.mxu0 0.0
        %v1186 = vand.u32 %v371, 4294901760
        %v1187 = vsub.f32 %v371, %v1186
        %1188 = vmatpush1.msra.mxu0 %v1187
        %1189 = vmatprep.subr.mxu0 0.0
        %v1190 = vand.u32 %v373, 4294901760
        %v1191 = vsub.f32 %v373, %v1190
        %1192 = vmatpush1.msra.mxu0 %v1191
        %1193 = vmatprep.subr.mxu0 0.0
        %1194 = vmatpush1.msra.mxu0 0.0
        %1195 = vmatprep.subr.mxu0 0.0
        %1196 = vmatpush1.msra.mxu0 0.0
        %1197 = vmatprep.subr.mxu0 0.0
        %1198 = vmatpush1.msra.mxu0 0.0
        %1199 = vmatprep.subr.mxu0 0.0
        %1200 = vmatpush1.msra.mxu0 0.0
        %1201 = vmatprep.subr.mxu0 0.0
        %1202 = vmatpush1.msra.mxu0 0.0
        %1203 = vmatprep.subr.mxu0 0.0
        %1204 = vmatpush1.msra.mxu0 0.0
        %1205 = vmatprep.subr.mxu0 0.0
        %1206 = vmatpush1.msra.mxu0 0.0
        %1207 = vmatprep.subr.mxu0 0.0
        %1208 = vmatpush1.msra.mxu0 0.0
        %1209 = vmatprep.subr.mxu0 0.0
        %1210 = vmatpush1.msra.mxu0 0.0
        %1211 = vmatprep.subr.mxu0 0.0
        %1212 = vmatpush1.msra.mxu0 0.0
        %1213 = vmatprep.subr.mxu0 0.0
        %1214 = vmatpush1.msra.mxu0 0.0
        %1215 = vmatprep.subr.mxu0 0.0
        %1216 = vmatpush1.msra.mxu0 0.0
        %1217 = vmatprep.subr.mxu0 0.0
        %1218 = vmatpush1.msra.mxu0 0.0
        %1219 = vmatprep.subr.mxu0 0.0
        %1220 = vmatpush1.msra.mxu0 0.0
        %1221 = vmatprep.subr.mxu0 0.0
        %1222 = vmatpush1.msra.mxu0 0.0
        %1223 = vmatprep.subr.mxu0 0.0
        %1224 = vmatpush1.msra.mxu0 0.0
        %1225 = vmatprep.subr.mxu0 0.0
        %1226 = vmatpush1.msra.mxu0 0.0
        %1227 = vmatprep.subr.mxu0 0.0
        %1228 = vmatpush1.msra.mxu0 0.0
        %1229 = vmatprep.subr.mxu0 0.0
        %1230 = vmatpush1.msra.mxu0 0.0
        %1231 = vmatprep.subr.mxu0 0.0
        %1232 = vmatpush1.msra.mxu0 0.0
        %1233 = vmatprep.subr.mxu0 0.0
        %1234 = vmatpush1.msra.mxu0 0.0
        %1235 = vmatprep.subr.mxu0 0.0
        %1236 = vmatpush1.msra.mxu0 0.0
        %1237 = vmatprep.subr.mxu0 0.0
        %1238 = vmatpush1.msra.mxu0 0.0
        %1239 = vmatprep.subr.mxu0 0.0
        %1240 = vmatpush1.msra.mxu0 0.0
        %1241 = vmatprep.subr.mxu0 0.0
        %1242 = vmatpush1.msra.mxu0 0.0
        %1243 = vmatprep.subr.mxu0 0.0
        %1244 = vmatpush1.msra.mxu0 0.0
        %1245 = vmatprep.mubr.f32.mxu0 0.0
        %v1246 = vand.u32 %v966, 4294901760
        %v1247 = vsub.f32 %v966, %v1246
        %1248 = vmatmul.mubr.f32.gmra.mrb[0].mxu0 %v1247
        %v1249 = vpop.f32.mrb[0].mxu0
        %v1250 = vadd.f32 %v1160, %v1249
        %v1251 = vpop.f32.mrb[0].mxu0
        %1252 = vmatprep.mubr.f32.mxu0 0.0
        %v1253 = vand.u32 %v969, 4294901760
        %v1254 = vsub.f32 %v969, %v1253
        %1255 = vmatmul.mubr.f32.gmra.mrb[0].mxu0 %v1254
        %v1256 = vpop.f32.mrb[0].mxu0
        %v1257 = vadd.f32 %v1166, %v1256
        %v1258 = vpop.f32.mrb[0].mxu0
        %1259 = vdwg.mxu0
        %1260 = vmatprep.subr.mxu0 0.0
        %v1261 = vand.u32 %v360, 4294901760
        %1262 = vmatpush1.msra.mxu0 %v1261
        %1263 = vmatprep.subr.mxu0 0.0
        %v1264 = vand.u32 %v361, 4294901760
        %1265 = vmatpush1.msra.mxu0 %v1264
        %1266 = vmatprep.subr.mxu0 0.0
        %v1267 = vand.u32 %v365, 4294901760
        %1268 = vmatpush1.msra.mxu0 %v1267
        %1269 = vmatprep.subr.mxu0 0.0
        %v1270 = vand.u32 %v367, 4294901760
        %1271 = vmatpush1.msra.mxu0 %v1270
        %1272 = vmatprep.subr.mxu0 0.0
        %v1273 = vand.u32 %v371, 4294901760
        %1274 = vmatpush1.msra.mxu0 %v1273
        %1275 = vmatprep.subr.mxu0 0.0
        %v1276 = vand.u32 %v373, 4294901760
        %1277 = vmatpush1.msra.mxu0 %v1276
        %1278 = vmatprep.subr.mxu0 0.0
        %1279 = vmatpush1.msra.mxu0 0.0
        %1280 = vmatprep.subr.mxu0 0.0
        %1281 = vmatpush1.msra.mxu0 0.0
        %1282 = vmatprep.subr.mxu0 0.0
        %1283 = vmatpush1.msra.mxu0 0.0
        %1284 = vmatprep.subr.mxu0 0.0
        %1285 = vmatpush1.msra.mxu0 0.0
        %1286 = vmatprep.subr.mxu0 0.0
        %1287 = vmatpush1.msra.mxu0 0.0
        %1288 = vmatprep.subr.mxu0 0.0
        %1289 = vmatpush1.msra.mxu0 0.0
        %1290 = vmatprep.subr.mxu0 0.0
        %1291 = vmatpush1.msra.mxu0 0.0
        %1292 = vmatprep.subr.mxu0 0.0
        %1293 = vmatpush1.msra.mxu0 0.0
        %1294 = vmatprep.subr.mxu0 0.0
        %1295 = vmatpush1.msra.mxu0 0.0
        %1296 = vmatprep.subr.mxu0 0.0
        %1297 = vmatpush1.msra.mxu0 0.0
        %1298 = vmatprep.subr.mxu0 0.0
        %1299 = vmatpush1.msra.mxu0 0.0
        %1300 = vmatprep.subr.mxu0 0.0
        %1301 = vmatpush1.msra.mxu0 0.0
        %1302 = vmatprep.subr.mxu0 0.0
        %1303 = vmatpush1.msra.mxu0 0.0
        %1304 = vmatprep.subr.mxu0 0.0
        %1305 = vmatpush1.msra.mxu0 0.0
        %1306 = vmatprep.subr.mxu0 0.0
        %1307 = vmatpush1.msra.mxu0 0.0
        %1308 = vmatprep.subr.mxu0 0.0
        %1309 = vmatpush1.msra.mxu0 0.0
        %1310 = vmatprep.subr.mxu0 0.0
        %1311 = vmatpush1.msra.mxu0 0.0
        %1312 = vmatprep.subr.mxu0 0.0
        %1313 = vmatpush1.msra.mxu0 0.0
        %1314 = vmatprep.subr.mxu0 0.0
        %1315 = vmatpush1.msra.mxu0 0.0
        %1316 = vmatprep.subr.mxu0 0.0
        %1317 = vmatpush1.msra.mxu0 0.0
        %1318 = vmatprep.subr.mxu0 0.0
        %1319 = vmatpush1.msra.mxu0 0.0
        %1320 = vmatprep.subr.mxu0 0.0
        %1321 = vmatpush1.msra.mxu0 0.0
        %1322 = vmatprep.subr.mxu0 0.0
        %1323 = vmatpush1.msra.mxu0 0.0
        %1324 = vmatprep.subr.mxu0 0.0
        %1325 = vmatpush1.msra.mxu0 0.0
        %1326 = vmatprep.subr.mxu0 0.0
        %1327 = vmatpush1.msra.mxu0 0.0
        %1328 = vmatprep.subr.mxu0 0.0
        %1329 = vmatpush1.msra.mxu0 0.0
        %1330 = vmatprep.mubr.f32.mxu0 0.0
        %v1331 = vand.u32 %v966, 4294901760
        %v1332 = vsub.f32 %v966, %v1331
        %v1333 = vand.u32 %v1332, 4294901760
        %1334 = vmatmul.mubr.f32.gmra.mrb[0].mxu0 %v1333
        %v1335 = vpop.f32.mrb[0].mxu0
        %v1336 = vadd.f32 %v1250, %v1335
        %v1337 = vpop.f32.mrb[0].mxu0
        %1338 = vmatprep.mubr.f32.mxu0 0.0
        %v1339 = vand.u32 %v969, 4294901760
        %v1340 = vsub.f32 %v969, %v1339
        %v1341 = vand.u32 %v1340, 4294901760
        %1342 = vmatmul.mubr.f32.gmra.mrb[0].mxu0 %v1341
        %v1343 = vpop.f32.mrb[0].mxu0
        %v1344 = vadd.f32 %v1257, %v1343
        %v1345 = vpop.f32.mrb[0].mxu0
        %1346 = vdwg.mxu0
        %1347 = vmatprep.subr.mxu0 0.0
        %v1348 = vand.u32 %v360, 4294901760
        %v1349 = vsub.f32 %v360, %v1348
        %v1350 = vand.u32 %v1349, 4294901760
        %1351 = vmatpush1.msra.mxu0 %v1350
        %1352 = vmatprep.subr.mxu0 0.0
        %v1353 = vand.u32 %v361, 4294901760
        %v1354 = vsub.f32 %v361, %v1353
        %v1355 = vand.u32 %v1354, 4294901760
        %1356 = vmatpush1.msra.mxu0 %v1355
        %1357 = vmatprep.subr.mxu0 0.0
        %v1358 = vand.u32 %v365, 4294901760
        %v1359 = vsub.f32 %v365, %v1358
        %v1360 = vand.u32 %v1359, 4294901760
        %1361 = vmatpush1.msra.mxu0 %v1360
        %1362 = vmatprep.subr.mxu0 0.0
        %v1363 = vand.u32 %v367, 4294901760
        %v1364 = vsub.f32 %v367, %v1363
        %v1365 = vand.u32 %v1364, 4294901760
        %1366 = vmatpush1.msra.mxu0 %v1365
        %1367 = vmatprep.subr.mxu0 0.0
        %v1368 = vand.u32 %v371, 4294901760
        %v1369 = vsub.f32 %v371, %v1368
        %v1370 = vand.u32 %v1369, 4294901760
        %1371 = vmatpush1.msra.mxu0 %v1370
        %1372 = vmatprep.subr.mxu0 0.0
        %v1373 = vand.u32 %v373, 4294901760
        %v1374 = vsub.f32 %v373, %v1373
        %v1375 = vand.u32 %v1374, 4294901760
        %1376 = vmatpush1.msra.mxu0 %v1375
        %1377 = vmatprep.subr.mxu0 0.0
        %1378 = vmatpush1.msra.mxu0 0.0
        %1379 = vmatprep.subr.mxu0 0.0
        %1380 = vmatpush1.msra.mxu0 0.0
        %1381 = vmatprep.subr.mxu0 0.0
        %1382 = vmatpush1.msra.mxu0 0.0
        %1383 = vmatprep.subr.mxu0 0.0
        %1384 = vmatpush1.msra.mxu0 0.0
        %1385 = vmatprep.subr.mxu0 0.0
        %1386 = vmatpush1.msra.mxu0 0.0
        %1387 = vmatprep.subr.mxu0 0.0
        %1388 = vmatpush1.msra.mxu0 0.0
        %1389 = vmatprep.subr.mxu0 0.0
        %1390 = vmatpush1.msra.mxu0 0.0
        %1391 = vmatprep.subr.mxu0 0.0
        %1392 = vmatpush1.msra.mxu0 0.0
        %1393 = vmatprep.subr.mxu0 0.0
        %1394 = vmatpush1.msra.mxu0 0.0
        %1395 = vmatprep.subr.mxu0 0.0
        %1396 = vmatpush1.msra.mxu0 0.0
        %1397 = vmatprep.subr.mxu0 0.0
        %1398 = vmatpush1.msra.mxu0 0.0
        %1399 = vmatprep.subr.mxu0 0.0
        %1400 = vmatpush1.msra.mxu0 0.0
        %1401 = vmatprep.subr.mxu0 0.0
        %1402 = vmatpush1.msra.mxu0 0.0
        %1403 = vmatprep.subr.mxu0 0.0
        %1404 = vmatpush1.msra.mxu0 0.0
        %1405 = vmatprep.subr.mxu0 0.0
        %1406 = vmatpush1.msra.mxu0 0.0
        %1407 = vmatprep.subr.mxu0 0.0
        %1408 = vmatpush1.msra.mxu0 0.0
        %1409 = vmatprep.subr.mxu0 0.0
        %1410 = vmatpush1.msra.mxu0 0.0
        %1411 = vmatprep.subr.mxu0 0.0
        %1412 = vmatpush1.msra.mxu0 0.0
        %1413 = vmatprep.subr.mxu0 0.0
        %1414 = vmatpush1.msra.mxu0 0.0
        %1415 = vmatprep.subr.mxu0 0.0
        %1416 = vmatpush1.msra.mxu0 0.0
        %1417 = vmatprep.subr.mxu0 0.0
        %1418 = vmatpush1.msra.mxu0 0.0
        %1419 = vmatprep.subr.mxu0 0.0
        %1420 = vmatpush1.msra.mxu0 0.0
        %1421 = vmatprep.subr.mxu0 0.0
        %1422 = vmatpush1.msra.mxu0 0.0
        %1423 = vmatprep.subr.mxu0 0.0
        %1424 = vmatpush1.msra.mxu0 0.0
        %1425 = vmatprep.subr.mxu0 0.0
        %1426 = vmatpush1.msra.mxu0 0.0
        %1427 = vmatprep.subr.mxu0 0.0
        %1428 = vmatpush1.msra.mxu0 0.0
        %1429 = vmatprep.mubr.f32.mxu0 0.0
        %v1430 = vand.u32 %v966, 4294901760
        %1431 = vmatmul.mubr.f32.gmra.mrb[0].mxu0 %v1430
        %v1432 = vpop.f32.mrb[0].mxu0
        %v1433 = vadd.f32 %v1336, %v1432
        %v1434 = vpop.f32.mrb[0].mxu0
        %1435 = vmatprep.mubr.f32.mxu0 0.0
        %v1436 = vand.u32 %v969, 4294901760
        %1437 = vmatmul.mubr.f32.gmra.mrb[0].mxu0 %v1436
        %v1438 = vpop.f32.mrb[0].mxu0
        %v1439 = vadd.f32 %v1344, %v1438
        %v1440 = vpop.f32.mrb[0].mxu0
        %1441 = vdwg.mxu0
        %1442 = vmatprep.subr.mxu0 0.0
        %v1443 = vand.u32 %v360, 4294901760
        %1444 = vmatpush1.msra.mxu0 %v1443
        %1445 = vmatprep.subr.mxu0 0.0
        %v1446 = vand.u32 %v361, 4294901760
        %1447 = vmatpush1.msra.mxu0 %v1446
        %1448 = vmatprep.subr.mxu0 0.0
        %v1449 = vand.u32 %v365, 4294901760
        %1450 = vmatpush1.msra.mxu0 %v1449
        %1451 = vmatprep.subr.mxu0 0.0
        %v1452 = vand.u32 %v367, 4294901760
        %1453 = vmatpush1.msra.mxu0 %v1452
        %1454 = vmatprep.subr.mxu0 0.0
        %v1455 = vand.u32 %v371, 4294901760
        %1456 = vmatpush1.msra.mxu0 %v1455
        %1457 = vmatprep.subr.mxu0 0.0
        %v1458 = vand.u32 %v373, 4294901760
        %1459 = vmatpush1.msra.mxu0 %v1458
        %1460 = vmatprep.subr.mxu0 0.0
        %1461 = vmatpush1.msra.mxu0 0.0
        %1462 = vmatprep.subr.mxu0 0.0
        %1463 = vmatpush1.msra.mxu0 0.0
        %1464 = vmatprep.subr.mxu0 0.0
        %1465 = vmatpush1.msra.mxu0 0.0
        %1466 = vmatprep.subr.mxu0 0.0
        %1467 = vmatpush1.msra.mxu0 0.0
        %1468 = vmatprep.subr.mxu0 0.0
        %1469 = vmatpush1.msra.mxu0 0.0
        %1470 = vmatprep.subr.mxu0 0.0
        %1471 = vmatpush1.msra.mxu0 0.0
        %1472 = vmatprep.subr.mxu0 0.0
        %1473 = vmatpush1.msra.mxu0 0.0
        %1474 = vmatprep.subr.mxu0 0.0
        %1475 = vmatpush1.msra.mxu0 0.0
        %1476 = vmatprep.subr.mxu0 0.0
        %1477 = vmatpush1.msra.mxu0 0.0
        %1478 = vmatprep.subr.mxu0 0.0
        %1479 = vmatpush1.msra.mxu0 0.0
        %1480 = vmatprep.subr.mxu0 0.0
        %1481 = vmatpush1.msra.mxu0 0.0
        %1482 = vmatprep.subr.mxu0 0.0
        %1483 = vmatpush1.msra.mxu0 0.0
        %1484 = vmatprep.subr.mxu0 0.0
        %1485 = vmatpush1.msra.mxu0 0.0
        %1486 = vmatprep.subr.mxu0 0.0
        %1487 = vmatpush1.msra.mxu0 0.0
        %1488 = vmatprep.subr.mxu0 0.0
        %1489 = vmatpush1.msra.mxu0 0.0
        %1490 = vmatprep.subr.mxu0 0.0
        %1491 = vmatpush1.msra.mxu0 0.0
        %1492 = vmatprep.subr.mxu0 0.0
        %1493 = vmatpush1.msra.mxu0 0.0
        %1494 = vmatprep.subr.mxu0 0.0
        %1495 = vmatpush1.msra.mxu0 0.0
        %1496 = vmatprep.subr.mxu0 0.0
        %1497 = vmatpush1.msra.mxu0 0.0
        %1498 = vmatprep.subr.mxu0 0.0
        %1499 = vmatpush1.msra.mxu0 0.0
        %1500 = vmatprep.subr.mxu0 0.0
        %1501 = vmatpush1.msra.mxu0 0.0
        %1502 = vmatprep.subr.mxu0 0.0
        %1503 = vmatpush1.msra.mxu0 0.0
        %1504 = vmatprep.subr.mxu0 0.0
        %1505 = vmatpush1.msra.mxu0 0.0
        %1506 = vmatprep.subr.mxu0 0.0
        %1507 = vmatpush1.msra.mxu0 0.0
        %1508 = vmatprep.subr.mxu0 0.0
        %1509 = vmatpush1.msra.mxu0 0.0
        %1510 = vmatprep.subr.mxu0 0.0
        %1511 = vmatpush1.msra.mxu0 0.0
        %1512 = vmatprep.mubr.f32.mxu0 0.0
        %v1513 = vand.u32 %v966, 4294901760
        %1514 = vmatmul.mubr.f32.gmra.mrb[0].mxu0 %v1513
        %v1515 = vpop.f32.mrb[0].mxu0
        %v1516 = vadd.f32 %v1433, %v1515
        %v1517 = vpop.f32.mrb[0].mxu0
        %1518 = vmatprep.mubr.f32.mxu0 0.0
        %v1519 = vand.u32 %v969, 4294901760
        %1520 = vmatmul.mubr.f32.gmra.mrb[0].mxu0 %v1519
        %v1521 = vpop.f32.mrb[0].mxu0
        %v1522 = vadd.f32 %v1439, %v1521
        %v1523 = vpop.f32.mrb[0].mxu0
        %1524 = vdwg.mxu0
        %v1525 = vxor.u32 %v1516, 2147483648
        %v1526 = vxor.u32 %v1522, 2147483648
        %v1527 = vmul.f32 %v1525, 1.442695
        %v1528 = vpow.pop %v1527
        %v1529 = vmul.f32 %v1526, 1.442695
        %v1530 = vpow.pop %v1529
        %v1531 = vadd.f32 %v1528, 1.0
        %v1532 = vadd.f32 %v1530, 1.0
        %v1533 = vrcp.pop %v1531
        %v1534 = vmul.f32 1.0, %v1533
        %v1535 = vrcp.pop %v1532
        %v1536 = vmul.f32 1.0, %v1535
        %v1537 = vmul.f32 %v944, %v1534
        %v1538 = vmul.f32 %v950, %v1536
        %1541 = vrot.lane.b32.xlu0 %v1537, 1
        %v1542 = vpop.permute.xlu0 %1541
        %1543 = vrot.lane.b32.xlu0 %v1538, 1
        %v1544 = vpop.permute.xlu0 %1543
        %v1547 = vadd.f32 %v360, %v1542
        %v1548 = vadd.f32 %v361, %v1544
        %1551 = vrot.lane.b32.xlu0 %v1547, 127
        %v1552 = vpop.permute.xlu0 %1551
        %1553 = vrot.lane.b32.xlu0 %v1548, 127
        %v1554 = vpop.permute.xlu0 %1553
        %vm1557 = vcmask 130048
        %1558 = vst.msk [vmem:[%s326] sm:$0xff] %vm1557, %v1552
        %1559 = vst.msk [vmem:[%s326 + $0x8] sm:$0xff] %vm1557, %v1554
        %p1560 = scmp.eq.s32.totalorder %s29, 0
        // Predicated region
        $region49: #{tpu_custom_call.1} parent=39 // pred_check
          %p1561 = pneg %p1560
        $region50: #{tpu_custom_call.1} parent=39 // pred_check_branch
          %1563 = sbr.rel (%p1561) target = $region52
        $region51: #{tpu_custom_call.1} parent=39 // pred_region
          %vm1564 = vcmask 7168
          %1565 = vst.msk [vmem:[%s354] sm:$0xff] %vm1564, 0.0
          %1566 = vst.msk [vmem:[%s354 + $0x8] sm:$0xff] %vm1564, 0.0
          %1567 = vst.msk [vmem:[%s359] sm:$0xff] %vm1564, 0.0
          %1568 = vst.msk [vmem:[%s359 + $0x8] sm:$0xff] %vm1564, 0.0
        $region52: #{tpu_custom_call.1} parent=39 // pred_fallthru
          _
        %s1569 = smul.u32 %s29, 16
        %v1570 = vlaneseq
        %v1571 = vand.u32 %v1570, 127
        %v1572 = vstv %s1569
        %v1573 = vadd.s32 %v1572, %v1571
        %vm1574 = vcmp.lt.s32.totalorder %v1573, 16
        %v1575 = vsel %vm1574, %v1552, 0.0
        %v1576 = vsel %vm1574, %v1554, 0.0
        %v1577 = vld [vmem:[%s354] sm:$0xff]
        %v1578 = vld [vmem:[%s354 + $0x8] sm:$0xff]
        %v1579 = vsel %vm1557, %v1575, 0.0
        %1580 = vadd.xlane.f32.xlu0 %v1579
        %v1581 = vpop.xlane.xlu0 %1580
        %v1582 = vsel %vm1557, %v1576, 0.0
        %1583 = vadd.xlane.f32.xlu0 %v1582
        %v1584 = vpop.xlane.xlu0 %1583
        %v1585 = vadd.f32 %v1577, %v1581
        %v1586 = vadd.f32 %v1578, %v1584
        %vm1587 = vcmask 7168
        %1588 = vst.msk [vmem:[%s354] sm:$0xff] %vm1587, %v1585
        %1589 = vst.msk [vmem:[%s354 + $0x8] sm:$0xff] %vm1587, %v1586
        %v1590 = vld [vmem:[%s359] sm:$0xff]
        %v1591 = vld [vmem:[%s359 + $0x8] sm:$0xff]
        %v1592 = vmul.f32 %v1575, %v1575
        %v1593 = vmul.f32 %v1576, %v1576
        %v1594 = vsel %vm1557, %v1592, 0.0
        %1595 = vadd.xlane.f32.xlu0 %v1594
        %v1596 = vpop.xlane.xlu0 %1595
        %v1597 = vsel %vm1557, %v1593, 0.0
        %1598 = vadd.xlane.f32.xlu0 %v1597
        %v1599 = vpop.xlane.xlu0 %1598
        %v1600 = vadd.f32 %v1590, %v1596
        %v1601 = vadd.f32 %v1591, %v1599
        %1602 = vst.msk [vmem:[%s359] sm:$0xff] %vm1587, %v1600
        %1603 = vst.msk [vmem:[%s359 + $0x8] sm:$0xff] %vm1587, %v1601
        %s1604 = sand.u32 %s158, 1
        %s1605 = scalar_lea.sflag [#allocation4], %s1604
        %s1606 = sand.u32 %s158, 1
        %s1607 = smul.addr %s1606, 16
        %s1608 = scalar_lea.vmem [#allocation7], %s1607
        %p1609 = scmp.lt.s32.totalorder %s28, 1
        %s1610 = scalar_select %p1609, %s28, 1
        %s1611 = smul.addr %s1610, 2
        %s1612 = smul.addr %s1611, 8
        %s1613 = scalar_lea.vmem %s6, %s1612
        %p1614 = scmp.lt.s32.totalorder %s28, 1
        %s1615 = scalar_select %p1614, %s28, 1
        %s1616 = smul.addr %s1615, 2
        %s1617 = smul.addr %s1616, 8
        %s1618 = scalar_lea.vmem %s7, %s1617
        // Predicated region
        $region53: #{tpu_custom_call.1} parent=39 // pred_check
          %p1619 = pneg %p168
        $region54: #{tpu_custom_call.1} parent=39 // pred_check_branch
          %1621 = sbr.rel (%p1619) target = $region56
        $region55: #{tpu_custom_call.1} parent=39 // pred_region
          %s1623 = ssub.s32 256, 256
          %1624 = vsyncadd %s1605, %s1623
          %s1625 = smul.addr %s28, 2
          %s1626 = sadd.s32 %s29, %s1625
          %s1627 = smul.addr %s1626, 128
          %s1628 = scalar_lea.hbm %s5, %s1627
          %s1629 = sshll.u32 %s1608, 4
          %s1630 = int_to_ptr.vmem [resolvable:$true] %s1629
          %1635 = dma.vmem_to_hbm [thread:$0]  %s1630, 256, %s1628, %s1605, 128, 128, 8
        $region56: #{tpu_custom_call.1} parent=39 // pred_fallthru
          _
        // Predicated region
        $region57: #{tpu_custom_call.1} parent=39 // pred_check
          %p1636 = pneg %p194
        $region58: #{tpu_custom_call.1} parent=39 // pred_check_branch
          %1638 = sbr.rel (%p1636) target = $region60
        $region59: #{tpu_custom_call.1} parent=39 // pred_region
          _
        $region60: #{tpu_custom_call.1} parent=39 // pred_fallthru
          _
        // Predicated region
        $region61: #{tpu_custom_call.1} parent=39 // pred_check
          %p1639 = pneg %p220
        $region62: #{tpu_custom_call.1} parent=39 // pred_check_branch
          %1641 = sbr.rel (%p1639) target = $region64
        $region63: #{tpu_custom_call.1} parent=39 // pred_region
          _
        $region64: #{tpu_custom_call.1} parent=39 // pred_fallthru
          _
      $region40: #{tpu_custom_call.1} parent=5 // pred_fallthru
        _
      %p1642 = scmp.le.s32.totalorder 2, %s19
      // Predicated region
      $region65: #{tpu_custom_call.1} parent=5 // pred_check
        %p1643 = pneg %p1642
      $region66: #{tpu_custom_call.1} parent=5 // pred_check_branch
        %1645 = sbr.rel (%p1643) target = $region68
      $region67: #{tpu_custom_call.1} parent=5 // pred_region
        %s1646 = ssub.s32 %s19, 2
        // Predicated region
        $region69: #{tpu_custom_call.1} parent=67 // pred_check
          %p1647 = pneg %p174
        $region70: #{tpu_custom_call.1} parent=67 // pred_check_branch
          %1649 = sbr.rel (%p1647) target = $region72
        $region71: #{tpu_custom_call.1} parent=67 // pred_region
          %s1650 = sand.u32 %s159, 1
          %s1651 = scalar_lea.sflag [#allocation4], %s1650
          %s1652 = sand.u32 %s159, 1
          %s1653 = smul.addr %s1652, 16
          %s1654 = scalar_lea.vmem [#allocation7], %s1653
          %1655 = dma.done %s1651, 256
        $region72: #{tpu_custom_call.1} parent=67 // pred_fallthru
          _
        // Predicated region
        $region73: #{tpu_custom_call.1} parent=67 // pred_check
          %p1656 = pneg %p200
        $region74: #{tpu_custom_call.1} parent=67 // pred_check_branch
          %1658 = sbr.rel (%p1656) target = $region76
        $region75: #{tpu_custom_call.1} parent=67 // pred_region
          %p1659 = scmp.lt.s32.totalorder %s30, 1
          %s1660 = scalar_select %p1659, %s30, 1
          %s1661 = smul.addr %s1660, 2
          %s1662 = smul.addr %s1661, 8
          %s1663 = scalar_lea.vmem %s6, %s1662
        $region76: #{tpu_custom_call.1} parent=67 // pred_fallthru
          _
        // Predicated region
        $region77: #{tpu_custom_call.1} parent=67 // pred_check
          %p1664 = pneg %p226
        $region78: #{tpu_custom_call.1} parent=67 // pred_check_branch
          %1666 = sbr.rel (%p1664) target = $region80
        $region79: #{tpu_custom_call.1} parent=67 // pred_region
          %p1667 = scmp.lt.s32.totalorder %s30, 1
          %s1668 = scalar_select %p1667, %s30, 1
          %s1669 = smul.addr %s1668, 2
          %s1670 = smul.addr %s1669, 8
          %s1671 = scalar_lea.vmem %s7, %s1670
        $region80: #{tpu_custom_call.1} parent=67 // pred_fallthru
          _
      $region68: #{tpu_custom_call.1} parent=5 // pred_fallthru
        _
    $region6: #{tpu_custom_call.1} parent=1 // loop_footer
      %s23 = sadd.s32 1, %s19
    $region7: #{tpu_custom_call.1} parent=1 // loop_footer_branch
      %18 = sbr.rel target = $region3
    $region8: #{tpu_custom_call.1} parent=1 // loop_exit
      _
    %1672 = vsyncpa [#allocation3], 1
    %s1673 = scalar_lea.sflag [#allocation3], 1
    %1674 = vsyncpa %s1673, 1
    %1675 = vsyncpa [#allocation6], 1
    %1676 = vsyncpa [#allocation4], 1
    %s1677 = scalar_lea.sflag [#allocation4], 1
    %1678 = vsyncpa %s1677, 1

</llo_original>
